<compile_context>
chip_gen: v5e
topology: v5e:2x2
jax: 0.10.0
libtpu: 0.0.40
codegen_flags: <defaults>
</compile_context>

<pallas_src>
import functools

import jax
import jax.numpy as jnp
from jax.experimental import pallas as pl
from jax.experimental.pallas import tpu as pltpu


def _lstm_kernel(T, B, H,
                 x_ref,      # (T*B, Din)  time-major flattened input (row = t*B + b)
                 w_ih0_ref,  # (Din, 4H)   layer-0 input weights (pre-transposed)
                 w_hh0_ref,  # (H,   4H)   layer-0 recurrent weights
                 b0_ref,     # (1,   4H)   layer-0 combined bias (b_ih + b_hh)
                 w_ih1_ref,  # (H,   4H)   layer-1 input weights
                 w_hh1_ref,  # (H,   4H)   layer-1 recurrent weights
                 b1_ref,     # (1,   4H)   layer-1 combined bias
                 fcw_ref,    # (H, out)    fc weight (pre-transposed)
                 fcb_ref,    # (1, out)    fc bias
                 out_ref,    # (B, out)
                 gx_ref):    # scratch (T*B, 4H): hoisted layer-0 input gates
    f32 = jnp.float32

    # ---- Hoisted layer-0 input projection: one big MXU matmul, off the
    # ---- recurrent critical path.
    gx_ref[...] = (
        jnp.dot(x_ref[...], w_ih0_ref[...], preferred_element_type=f32)
        + b0_ref[...]
    )

    def cell(gates, c_prev):
        # PyTorch gate ordering: input, forget, cell (g), output.
        i_g = jax.nn.sigmoid(gates[:, 0 * H:1 * H])
        f_g = jax.nn.sigmoid(gates[:, 1 * H:2 * H])
        g_g = jnp.tanh(gates[:, 2 * H:3 * H])
        o_g = jax.nn.sigmoid(gates[:, 3 * H:4 * H])
        c_new = f_g * c_prev + i_g * g_g
        h_new = o_g * jnp.tanh(c_new)
        return h_new, c_new

    zero = jnp.zeros((B, H), f32)
    h0, c0, h1, c1 = zero, zero, zero, zero

    # ---- Fused 2-layer recurrence, statically unrolled. h/c stay in vregs.
    for t in range(T):
        gx_t = gx_ref[t * B:(t + 1) * B, :]                     # static slice
        g0 = gx_t + jnp.dot(h0, w_hh0_ref[...], preferred_element_type=f32)
        h0, c0 = cell(g0, c0)

        # Layer 1 consumes h0_t immediately (no seq_buf). The two dots are
        # independent and pipeline on the MXU under the unrolled schedule.
        g1 = (jnp.dot(h0, w_ih1_ref[...], preferred_element_type=f32)
              + jnp.dot(h1, w_hh1_ref[...], preferred_element_type=f32)
              + b1_ref[...])
        h1, c1 = cell(g1, c1)

    # fc(out[:, -1, :]) == fc applied to the final hidden state of the top layer.
    out_ref[...] = (
        jnp.dot(h1, fcw_ref[...], preferred_element_type=f32) + fcb_ref[...]
    )


@jax.jit
def lstm_model_forward(x_btd, params):
    """x_btd: (B, T, input_dim) float32, batch-first like PyTorch."""
    B, T, Din = x_btd.shape
    H = params["w_hh0"].shape[0]
    out_dim = params["fcw"].shape[1]

    # Layout plumbing in plain JAX: time-major, flattened to (T*B, Din) so the
    # kernel's hoisted layer-0 input projection is a single 2-D MXU matmul.
    x_flat = jnp.transpose(x_btd, (1, 0, 2)).reshape(T * B, Din)

    kernel = functools.partial(_lstm_kernel, T, B, H)

    return pl.pallas_call(
        kernel,
        out_shape=jax.ShapeDtypeStruct((B, out_dim), jnp.float32),
        scratch_shapes=[
            pltpu.VMEM((T * B, 4 * H), jnp.float32),   # hoisted layer-0 gates
        ],
        compiler_params=pltpu.CompilerParams(
            # Plenty for toy shapes; raise (and/or stage the hoisted gates
            # through HBM in T-chunks) when scaling T/B/H, esp. on v7x (64 MiB).
            vmem_limit_bytes=32 * 1024 * 1024,
        ),
    )(
        x_flat,
        params["w_ih0"], params["w_hh0"], params["b0"],
        params["w_ih1"], params["w_hh1"], params["b1"],
        params["fcw"], params["fcb"],
    )


def init_params(key, input_dim, hidden_dim, layer_dim, output_dim):
    """Deterministic PyTorch-style uniform init; weights stored pre-transposed."""
    assert layer_dim == 2, "this script hardcodes layer_dim=2"
    bound = 1.0 / jnp.sqrt(jnp.float32(hidden_dim))
    keys = jax.random.split(key, 10)

    def u(k, shape):
        return jax.random.uniform(k, shape, jnp.float32, -bound, bound)

    # nn.LSTM stores W_ih: (4H, in), W_hh: (4H, H); pre-transpose for the kernel.
    w_ih0 = u(keys[0], (4 * hidden_dim, input_dim)).T        # (Din, 4H)
    w_hh0 = u(keys[1], (4 * hidden_dim, hidden_dim)).T       # (H,   4H)
    b0 = (u(keys[2], (4 * hidden_dim,)) + u(keys[3], (4 * hidden_dim,)))[None, :]

    w_ih1 = u(keys[4], (4 * hidden_dim, hidden_dim)).T       # (H, 4H)
    w_hh1 = u(keys[5], (4 * hidden_dim, hidden_dim)).T       # (H, 4H)
    b1 = (u(keys[6], (4 * hidden_dim,)) + u(keys[7], (4 * hidden_dim,)))[None, :]

    fcw = u(keys[8], (output_dim, hidden_dim)).T             # (H, out)
    fcb = u(keys[9], (output_dim,))[None, :]                 # (1, out)

    return dict(w_ih0=w_ih0, w_hh0=w_hh0, b0=b0,
                w_ih1=w_ih1, w_hh1=w_hh1, b1=b1,
                fcw=fcw, fcb=fcb)


def _reference_forward(x_btd, params):
    """Pure-JAX reference for correctness checking."""
    B, T, _ = x_btd.shape
    H = params["w_hh0"].shape[0]

    def run_layer(seq, w_ih, w_hh, b):
        h = jnp.zeros((B, H), jnp.float32)
        c = jnp.zeros((B, H), jnp.float32)
        outs = []
        for t in range(T):
            gates = seq[:, t, :] @ w_ih + h @ w_hh + b
            i = jax.nn.sigmoid(gates[:, 0 * H:1 * H])
            f = jax.nn.sigmoid(gates[:, 1 * H:2 * H])
            g = jnp.tanh(gates[:, 2 * H:3 * H])
            o = jax.nn.sigmoid(gates[:, 3 * H:4 * H])
            c = f * c + i * g
            h = o * jnp.tanh(c)
            outs.append(h)
        return jnp.stack(outs, axis=1), h

    seq1, _ = run_layer(x_btd, params["w_ih0"], params["w_hh0"], params["b0"])
    _, h_last = run_layer(seq1, params["w_ih1"], params["w_hh1"], params["b1"])
    return h_last @ params["fcw"] + params["fcb"]


if __name__ == "__main__":
    # Small shapes consistent with the module's forward.
    B, T = 2, 8
    input_dim, hidden_dim, layer_dim, output_dim = 16, 32, 2, 4

    key = jax.random.PRNGKey(0)
    k_x, k_p = jax.random.split(key)
    x = jax.random.normal(k_x, (B, T, input_dim), dtype=jnp.float32)
    params = init_params(k_p, input_dim, hidden_dim, layer_dim, output_dim)

    out = lstm_model_forward(x, params)
    out = jax.block_until_ready(out)

    ref = _reference_forward(x, params)
    assert out.shape == (B, output_dim)
    assert jnp.allclose(out, ref, atol=1e-4, rtol=1e-4), "mismatch vs reference"

    print("KERNEL_OK")
</pallas_src>

<mosaic_0001>
module attributes {stable_mosaic.version = 11 : i64} {
  func.func @_lstm_kernel(%arg0: memref<16x16xf32, #tpu.memory_space<vmem>>, %arg1: memref<16x128xf32, #tpu.memory_space<vmem>>, %arg2: memref<32x128xf32, #tpu.memory_space<vmem>>, %arg3: memref<1x128xf32, #tpu.memory_space<vmem>>, %arg4: memref<32x128xf32, #tpu.memory_space<vmem>>, %arg5: memref<32x128xf32, #tpu.memory_space<vmem>>, %arg6: memref<1x128xf32, #tpu.memory_space<vmem>>, %arg7: memref<32x4xf32, #tpu.memory_space<vmem>>, %arg8: memref<1x4xf32, #tpu.memory_space<vmem>>, %arg9: memref<2x4xf32, #tpu.memory_space<vmem>>, %arg10: memref<16x128xf32, #tpu.memory_space<vmem>>) attributes {dimension_semantics = [], scalar_prefetch = 0 : i64, scratch_operands = 1 : i64, tpu.core_type = #tpu.core_type<tc>} {
    %c0 = arith.constant 0 : index
    %c0_0 = arith.constant 0 : index
    %0 = vector.load %arg0[%c0, %c0_0] : memref<16x16xf32, #tpu.memory_space<vmem>>, vector<16x16xf32>
    %c0_1 = arith.constant 0 : index
    %c0_2 = arith.constant 0 : index
    %1 = vector.load %arg1[%c0_1, %c0_2] : memref<16x128xf32, #tpu.memory_space<vmem>>, vector<16x128xf32>
    %cst = arith.constant dense<0.000000e+00> : vector<16x128xf32>
    %2 = tpu.matmul %0, %1, %cst {dimension_numbers = #tpu.dot_dimension_numbers<[1], [0], [0], [1], [0, 0, 1, 1], [], []>} : vector<16x16xf32>, vector<16x128xf32>, vector<16x128xf32> -> vector<16x128xf32>
    %c0_3 = arith.constant 0 : index
    %c0_4 = arith.constant 0 : index
    %3 = vector.load %arg3[%c0_3, %c0_4] : memref<1x128xf32, #tpu.memory_space<vmem>>, vector<1x128xf32>
    %4 = vector.broadcast %3 : vector<1x128xf32> to vector<16x128xf32>
    %5 = arith.addf %2, %4 : vector<16x128xf32>
    %c0_5 = arith.constant 0 : index
    %c0_6 = arith.constant 0 : index
    %6 = vector.load %arg10[%c0_5, %c0_6] : memref<16x128xf32, #tpu.memory_space<vmem>>, vector<16x128xf32>
    tpu.vector_store %arg10[%c0_5, %c0_6], %5 {strides = array<i32>} : memref<16x128xf32, #tpu.memory_space<vmem>>, vector<16x128xf32>,
    %cst_7 = arith.constant 0.000000e+00 : f32
    %7 = vector.broadcast %cst_7 : f32 to vector<2x32xf32>
    %c0_8 = arith.constant 0 : index
    %c0_9 = arith.constant 0 : index
    %8 = vector.load %arg10[%c0_8, %c0_9] : memref<16x128xf32, #tpu.memory_space<vmem>>, vector<2x128xf32>
    %c0_10 = arith.constant 0 : index
    %c0_11 = arith.constant 0 : index
    %9 = vector.load %arg2[%c0_10, %c0_11] : memref<32x128xf32, #tpu.memory_space<vmem>>, vector<32x128xf32>
    %cst_12 = arith.constant dense<0.000000e+00> : vector<2x128xf32>
    %10 = tpu.matmul %7, %9, %cst_12 {dimension_numbers = #tpu.dot_dimension_numbers<[1], [0], [0], [1], [0, 0, 1, 1], [], []>} : vector<2x32xf32>, vector<32x128xf32>, vector<2x128xf32> -> vector<2x128xf32>
    %11 = arith.addf %8, %10 : vector<2x128xf32>
    %12 = vector.extract_strided_slice %11 {offsets = [0, 0], sizes = [2, 32], strides = [1, 1]} : vector<2x128xf32> to vector<2x32xf32>
    %13 = arith.negf %12 : vector<2x32xf32>
    %14 = math.exp %13 : vector<2x32xf32>
    %cst_13 = arith.constant 1.000000e+00 : f32
    %15 = vector.broadcast %cst_13 : f32 to vector<2x32xf32>
    %16 = arith.addf %15, %14 : vector<2x32xf32>
    %17 = arith.divf %15, %16 : vector<2x32xf32>
    %18 = vector.extract_strided_slice %11 {offsets = [0, 32], sizes = [2, 32], strides = [1, 1]} : vector<2x128xf32> to vector<2x32xf32>
    %19 = arith.negf %18 : vector<2x32xf32>
    %20 = math.exp %19 : vector<2x32xf32>
    %cst_14 = arith.constant 1.000000e+00 : f32
    %21 = vector.broadcast %cst_14 : f32 to vector<2x32xf32>
    %22 = arith.addf %21, %20 : vector<2x32xf32>
    %23 = arith.divf %21, %22 : vector<2x32xf32>
    %24 = vector.extract_strided_slice %11 {offsets = [0, 64], sizes = [2, 32], strides = [1, 1]} : vector<2x128xf32> to vector<2x32xf32>
    %25 = math.tanh %24 : vector<2x32xf32>
    %26 = vector.extract_strided_slice %11 {offsets = [0, 96], sizes = [2, 32], strides = [1, 1]} : vector<2x128xf32> to vector<2x32xf32>
    %27 = arith.negf %26 : vector<2x32xf32>
    %28 = math.exp %27 : vector<2x32xf32>
    %cst_15 = arith.constant 1.000000e+00 : f32
    %29 = vector.broadcast %cst_15 : f32 to vector<2x32xf32>
    %30 = arith.addf %29, %28 : vector<2x32xf32>
    %31 = arith.divf %29, %30 : vector<2x32xf32>
    %32 = arith.mulf %23, %7 : vector<2x32xf32>
    %33 = arith.mulf %17, %25 : vector<2x32xf32>
    %34 = arith.addf %32, %33 : vector<2x32xf32>
    %35 = math.tanh %34 : vector<2x32xf32>
    %36 = arith.mulf %31, %35 : vector<2x32xf32>
    %c0_16 = arith.constant 0 : index
    %c0_17 = arith.constant 0 : index
    %37 = vector.load %arg4[%c0_16, %c0_17] : memref<32x128xf32, #tpu.memory_space<vmem>>, vector<32x128xf32>
    %cst_18 = arith.constant dense<0.000000e+00> : vector<2x128xf32>
    %38 = tpu.matmul %36, %37, %cst_18 {dimension_numbers = #tpu.dot_dimension_numbers<[1], [0], [0], [1], [0, 0, 1, 1], [], []>} : vector<2x32xf32>, vector<32x128xf32>, vector<2x128xf32> -> vector<2x128xf32>
    %c0_19 = arith.constant 0 : index
    %c0_20 = arith.constant 0 : index
    %39 = vector.load %arg5[%c0_19, %c0_20] : memref<32x128xf32, #tpu.memory_space<vmem>>, vector<32x128xf32>
    %cst_21 = arith.constant dense<0.000000e+00> : vector<2x128xf32>
    %40 = tpu.matmul %7, %39, %cst_21 {dimension_numbers = #tpu.dot_dimension_numbers<[1], [0], [0], [1], [0, 0, 1, 1], [], []>} : vector<2x32xf32>, vector<32x128xf32>, vector<2x128xf32> -> vector<2x128xf32>
    %41 = arith.addf %38, %40 : vector<2x128xf32>
    %c0_22 = arith.constant 0 : index
    %c0_23 = arith.constant 0 : index
    %42 = vector.load %arg6[%c0_22, %c0_23] : memref<1x128xf32, #tpu.memory_space<vmem>>, vector<1x128xf32>
    %43 = vector.broadcast %42 : vector<1x128xf32> to vector<2x128xf32>
    %44 = arith.addf %41, %43 : vector<2x128xf32>
    %45 = vector.extract_strided_slice %44 {offsets = [0, 0], sizes = [2, 32], strides = [1, 1]} : vector<2x128xf32> to vector<2x32xf32>
    %46 = arith.negf %45 : vector<2x32xf32>
    %47 = math.exp %46 : vector<2x32xf32>
    %cst_24 = arith.constant 1.000000e+00 : f32
    %48 = vector.broadcast %cst_24 : f32 to vector<2x32xf32>
    %49 = arith.addf %48, %47 : vector<2x32xf32>
    %50 = arith.divf %48, %49 : vector<2x32xf32>
    %51 = vector.extract_strided_slice %44 {offsets = [0, 32], sizes = [2, 32], strides = [1, 1]} : vector<2x128xf32> to vector<2x32xf32>
    %52 = arith.negf %51 : vector<2x32xf32>
    %53 = math.exp %52 : vector<2x32xf32>
    %cst_25 = arith.constant 1.000000e+00 : f32
    %54 = vector.broadcast %cst_25 : f32 to vector<2x32xf32>
    %55 = arith.addf %54, %53 : vector<2x32xf32>
    %56 = arith.divf %54, %55 : vector<2x32xf32>
    %57 = vector.extract_strided_slice %44 {offsets = [0, 64], sizes = [2, 32], strides = [1, 1]} : vector<2x128xf32> to vector<2x32xf32>
    %58 = math.tanh %57 : vector<2x32xf32>
    %59 = vector.extract_strided_slice %44 {offsets = [0, 96], sizes = [2, 32], strides = [1, 1]} : vector<2x128xf32> to vector<2x32xf32>
    %60 = arith.negf %59 : vector<2x32xf32>
    %61 = math.exp %60 : vector<2x32xf32>
    %cst_26 = arith.constant 1.000000e+00 : f32
    %62 = vector.broadcast %cst_26 : f32 to vector<2x32xf32>
    %63 = arith.addf %62, %61 : vector<2x32xf32>
    %64 = arith.divf %62, %63 : vector<2x32xf32>
    %65 = arith.mulf %56, %7 : vector<2x32xf32>
    %66 = arith.mulf %50, %58 : vector<2x32xf32>
    %67 = arith.addf %65, %66 : vector<2x32xf32>
    %68 = math.tanh %67 : vector<2x32xf32>
    %69 = arith.mulf %64, %68 : vector<2x32xf32>
    %c2 = arith.constant 2 : index
    %c0_27 = arith.constant 0 : index
    %70 = vector.load %arg10[%c2, %c0_27] : memref<16x128xf32, #tpu.memory_space<vmem>>, vector<2x128xf32>
    %c0_28 = arith.constant 0 : index
    %c0_29 = arith.constant 0 : index
    %71 = vector.load %arg2[%c0_28, %c0_29] : memref<32x128xf32, #tpu.memory_space<vmem>>, vector<32x128xf32>
    %cst_30 = arith.constant dense<0.000000e+00> : vector<2x128xf32>
    %72 = tpu.matmul %36, %71, %cst_30 {dimension_numbers = #tpu.dot_dimension_numbers<[1], [0], [0], [1], [0, 0, 1, 1], [], []>} : vector<2x32xf32>, vector<32x128xf32>, vector<2x128xf32> -> vector<2x128xf32>
    %73 = arith.addf %70, %72 : vector<2x128xf32>
    %74 = vector.extract_strided_slice %73 {offsets = [0, 0], sizes = [2, 32], strides = [1, 1]} : vector<2x128xf32> to vector<2x32xf32>
    %75 = arith.negf %74 : vector<2x32xf32>
    %76 = math.exp %75 : vector<2x32xf32>
    %cst_31 = arith.constant 1.000000e+00 : f32
    %77 = vector.broadcast %cst_31 : f32 to vector<2x32xf32>
    %78 = arith.addf %77, %76 : vector<2x32xf32>
    %79 = arith.divf %77, %78 : vector<2x32xf32>
    %80 = vector.extract_strided_slice %73 {offsets = [0, 32], sizes = [2, 32], strides = [1, 1]} : vector<2x128xf32> to vector<2x32xf32>
    %81 = arith.negf %80 : vector<2x32xf32>
    %82 = math.exp %81 : vector<2x32xf32>
    %cst_32 = arith.constant 1.000000e+00 : f32
    %83 = vector.broadcast %cst_32 : f32 to vector<2x32xf32>
    %84 = arith.addf %83, %82 : vector<2x32xf32>
    %85 = arith.divf %83, %84 : vector<2x32xf32>
    %86 = vector.extract_strided_slice %73 {offsets = [0, 64], sizes = [2, 32], strides = [1, 1]} : vector<2x128xf32> to vector<2x32xf32>
    %87 = math.tanh %86 : vector<2x32xf32>
    %88 = vector.extract_strided_slice %73 {offsets = [0, 96], sizes = [2, 32], strides = [1, 1]} : vector<2x128xf32> to vector<2x32xf32>
    %89 = arith.negf %88 : vector<2x32xf32>
    %90 = math.exp %89 : vector<2x32xf32>
    %cst_33 = arith.constant 1.000000e+00 : f32
    %91 = vector.broadcast %cst_33 : f32 to vector<2x32xf32>
    %92 = arith.addf %91, %90 : vector<2x32xf32>
    %93 = arith.divf %91, %92 : vector<2x32xf32>
    %94 = arith.mulf %85, %34 : vector<2x32xf32>
    %95 = arith.mulf %79, %87 : vector<2x32xf32>
    %96 = arith.addf %94, %95 : vector<2x32xf32>
    %97 = math.tanh %96 : vector<2x32xf32>
    %98 = arith.mulf %93, %97 : vector<2x32xf32>
    %c0_34 = arith.constant 0 : index
    %c0_35 = arith.constant 0 : index
    %99 = vector.load %arg4[%c0_34, %c0_35] : memref<32x128xf32, #tpu.memory_space<vmem>>, vector<32x128xf32>
    %cst_36 = arith.constant dense<0.000000e+00> : vector<2x128xf32>
    %100 = tpu.matmul %98, %99, %cst_36 {dimension_numbers = #tpu.dot_dimension_numbers<[1], [0], [0], [1], [0, 0, 1, 1], [], []>} : vector<2x32xf32>, vector<32x128xf32>, vector<2x128xf32> -> vector<2x128xf32>
    %c0_37 = arith.constant 0 : index
    %c0_38 = arith.constant 0 : index
    %101 = vector.load %arg5[%c0_37, %c0_38] : memref<32x128xf32, #tpu.memory_space<vmem>>, vector<32x128xf32>
    %cst_39 = arith.constant dense<0.000000e+00> : vector<2x128xf32>
    %102 = tpu.matmul %69, %101, %cst_39 {dimension_numbers = #tpu.dot_dimension_numbers<[1], [0], [0], [1], [0, 0, 1, 1], [], []>} : vector<2x32xf32>, vector<32x128xf32>, vector<2x128xf32> -> vector<2x128xf32>
    %103 = arith.addf %100, %102 : vector<2x128xf32>
    %c0_40 = arith.constant 0 : index
    %c0_41 = arith.constant 0 : index
    %104 = vector.load %arg6[%c0_40, %c0_41] : memref<1x128xf32, #tpu.memory_space<vmem>>, vector<1x128xf32>
    %105 = vector.broadcast %104 : vector<1x128xf32> to vector<2x128xf32>
    %106 = arith.addf %103, %105 : vector<2x128xf32>
    %107 = vector.extract_strided_slice %106 {offsets = [0, 0], sizes = [2, 32], strides = [1, 1]} : vector<2x128xf32> to vector<2x32xf32>
    %108 = arith.negf %107 : vector<2x32xf32>
    %109 = math.exp %108 : vector<2x32xf32>
    %cst_42 = arith.constant 1.000000e+00 : f32
    %110 = vector.broadcast %cst_42 : f32 to vector<2x32xf32>
    %111 = arith.addf %110, %109 : vector<2x32xf32>
    %112 = arith.divf %110, %111 : vector<2x32xf32>
    %113 = vector.extract_strided_slice %106 {offsets = [0, 32], sizes = [2, 32], strides = [1, 1]} : vector<2x128xf32> to vector<2x32xf32>
    %114 = arith.negf %113 : vector<2x32xf32>
    %115 = math.exp %114 : vector<2x32xf32>
    %cst_43 = arith.constant 1.000000e+00 : f32
    %116 = vector.broadcast %cst_43 : f32 to vector<2x32xf32>
    %117 = arith.addf %116, %115 : vector<2x32xf32>
    %118 = arith.divf %116, %117 : vector<2x32xf32>
    %119 = vector.extract_strided_slice %106 {offsets = [0, 64], sizes = [2, 32], strides = [1, 1]} : vector<2x128xf32> to vector<2x32xf32>
    %120 = math.tanh %119 : vector<2x32xf32>
    %121 = vector.extract_strided_slice %106 {offsets = [0, 96], sizes = [2, 32], strides = [1, 1]} : vector<2x128xf32> to vector<2x32xf32>
    %122 = arith.negf %121 : vector<2x32xf32>
    %123 = math.exp %122 : vector<2x32xf32>
    %cst_44 = arith.constant 1.000000e+00 : f32
    %124 = vector.broadcast %cst_44 : f32 to vector<2x32xf32>
    %125 = arith.addf %124, %123 : vector<2x32xf32>
    %126 = arith.divf %124, %125 : vector<2x32xf32>
    %127 = arith.mulf %118, %67 : vector<2x32xf32>
    %128 = arith.mulf %112, %120 : vector<2x32xf32>
    %129 = arith.addf %127, %128 : vector<2x32xf32>
    %130 = math.tanh %129 : vector<2x32xf32>
    %131 = arith.mulf %126, %130 : vector<2x32xf32>
    %c4 = arith.constant 4 : index
    %c0_45 = arith.constant 0 : index
    %132 = vector.load %arg10[%c4, %c0_45] : memref<16x128xf32, #tpu.memory_space<vmem>>, vector<2x128xf32>
    %c0_46 = arith.constant 0 : index
    %c0_47 = arith.constant 0 : index
    %133 = vector.load %arg2[%c0_46, %c0_47] : memref<32x128xf32, #tpu.memory_space<vmem>>, vector<32x128xf32>
    %cst_48 = arith.constant dense<0.000000e+00> : vector<2x128xf32>
    %134 = tpu.matmul %98, %133, %cst_48 {dimension_numbers = #tpu.dot_dimension_numbers<[1], [0], [0], [1], [0, 0, 1, 1], [], []>} : vector<2x32xf32>, vector<32x128xf32>, vector<2x128xf32> -> vector<2x128xf32>
    %135 = arith.addf %132, %134 : vector<2x128xf32>
    %136 = vector.extract_strided_slice %135 {offsets = [0, 0], sizes = [2, 32], strides = [1, 1]} : vector<2x128xf32> to vector<2x32xf32>
    %137 = arith.negf %136 : vector<2x32xf32>
    %138 = math.exp %137 : vector<2x32xf32>
    %cst_49 = arith.constant 1.000000e+00 : f32
    %139 = vector.broadcast %cst_49 : f32 to vector<2x32xf32>
    %140 = arith.addf %139, %138 : vector<2x32xf32>
    %141 = arith.divf %139, %140 : vector<2x32xf32>
    %142 = vector.extract_strided_slice %135 {offsets = [0, 32], sizes = [2, 32], strides = [1, 1]} : vector<2x128xf32> to vector<2x32xf32>
    %143 = arith.negf %142 : vector<2x32xf32>
    %144 = math.exp %143 : vector<2x32xf32>
    %cst_50 = arith.constant 1.000000e+00 : f32
    %145 = vector.broadcast %cst_50 : f32 to vector<2x32xf32>
    %146 = arith.addf %145, %144 : vector<2x32xf32>
    %147 = arith.divf %145, %146 : vector<2x32xf32>
    %148 = vector.extract_strided_slice %135 {offsets = [0, 64], sizes = [2, 32], strides = [1, 1]} : vector<2x128xf32> to vector<2x32xf32>
    %149 = math.tanh %148 : vector<2x32xf32>
    %150 = vector.extract_strided_slice %135 {offsets = [0, 96], sizes = [2, 32], strides = [1, 1]} : vector<2x128xf32> to vector<2x32xf32>
    %151 = arith.negf %150 : vector<2x32xf32>
    %152 = math.exp %151 : vector<2x32xf32>
    %cst_51 = arith.constant 1.000000e+00 : f32
    %153 = vector.broadcast %cst_51 : f32 to vector<2x32xf32>
    %154 = arith.addf %153, %152 : vector<2x32xf32>
    %155 = arith.divf %153, %154 : vector<2x32xf32>
    %156 = arith.mulf %147, %96 : vector<2x32xf32>
    %157 = arith.mulf %141, %149 : vector<2x32xf32>
    %158 = arith.addf %156, %157 : vector<2x32xf32>
    %159 = math.tanh %158 : vector<2x32xf32>
    %160 = arith.mulf %155, %159 : vector<2x32xf32>
    %c0_52 = arith.constant 0 : index
    %c0_53 = arith.constant 0 : index
    %161 = vector.load %arg4[%c0_52, %c0_53] : memref<32x128xf32, #tpu.memory_space<vmem>>, vector<32x128xf32>
    %cst_54 = arith.constant dense<0.000000e+00> : vector<2x128xf32>
    %162 = tpu.matmul %160, %161, %cst_54 {dimension_numbers = #tpu.dot_dimension_numbers<[1], [0], [0], [1], [0, 0, 1, 1], [], []>} : vector<2x32xf32>, vector<32x128xf32>, vector<2x128xf32> -> vector<2x128xf32>
    %c0_55 = arith.constant 0 : index
    %c0_56 = arith.constant 0 : index
    %163 = vector.load %arg5[%c0_55, %c0_56] : memref<32x128xf32, #tpu.memory_space<vmem>>, vector<32x128xf32>
    %cst_57 = arith.constant dense<0.000000e+00> : vector<2x128xf32>
    %164 = tpu.matmul %131, %163, %cst_57 {dimension_numbers = #tpu.dot_dimension_numbers<[1], [0], [0], [1], [0, 0, 1, 1], [], []>} : vector<2x32xf32>, vector<32x128xf32>, vector<2x128xf32> -> vector<2x128xf32>
    %165 = arith.addf %162, %164 : vector<2x128xf32>
    %c0_58 = arith.constant 0 : index
    %c0_59 = arith.constant 0 : index
    %166 = vector.load %arg6[%c0_58, %c0_59] : memref<1x128xf32, #tpu.memory_space<vmem>>, vector<1x128xf32>
    %167 = vector.broadcast %166 : vector<1x128xf32> to vector<2x128xf32>
    %168 = arith.addf %165, %167 : vector<2x128xf32>
    %169 = vector.extract_strided_slice %168 {offsets = [0, 0], sizes = [2, 32], strides = [1, 1]} : vector<2x128xf32> to vector<2x32xf32>
    %170 = arith.negf %169 : vector<2x32xf32>
    %171 = math.exp %170 : vector<2x32xf32>
    %cst_60 = arith.constant 1.000000e+00 : f32
    %172 = vector.broadcast %cst_60 : f32 to vector<2x32xf32>
    %173 = arith.addf %172, %171 : vector<2x32xf32>
    %174 = arith.divf %172, %173 : vector<2x32xf32>
    %175 = vector.extract_strided_slice %168 {offsets = [0, 32], sizes = [2, 32], strides = [1, 1]} : vector<2x128xf32> to vector<2x32xf32>
    %176 = arith.negf %175 : vector<2x32xf32>
    %177 = math.exp %176 : vector<2x32xf32>
    %cst_61 = arith.constant 1.000000e+00 : f32
    %178 = vector.broadcast %cst_61 : f32 to vector<2x32xf32>
    %179 = arith.addf %178, %177 : vector<2x32xf32>
    %180 = arith.divf %178, %179 : vector<2x32xf32>
    %181 = vector.extract_strided_slice %168 {offsets = [0, 64], sizes = [2, 32], strides = [1, 1]} : vector<2x128xf32> to vector<2x32xf32>
    %182 = math.tanh %181 : vector<2x32xf32>
    %183 = vector.extract_strided_slice %168 {offsets = [0, 96], sizes = [2, 32], strides = [1, 1]} : vector<2x128xf32> to vector<2x32xf32>
    %184 = arith.negf %183 : vector<2x32xf32>
    %185 = math.exp %184 : vector<2x32xf32>
    %cst_62 = arith.constant 1.000000e+00 : f32
    %186 = vector.broadcast %cst_62 : f32 to vector<2x32xf32>
    %187 = arith.addf %186, %185 : vector<2x32xf32>
    %188 = arith.divf %186, %187 : vector<2x32xf32>
    %189 = arith.mulf %180, %129 : vector<2x32xf32>
    %190 = arith.mulf %174, %182 : vector<2x32xf32>
    %191 = arith.addf %189, %190 : vector<2x32xf32>
    %192 = math.tanh %191 : vector<2x32xf32>
    %193 = arith.mulf %188, %192 : vector<2x32xf32>
    %c6 = arith.constant 6 : index
    %c0_63 = arith.constant 0 : index
    %194 = vector.load %arg10[%c6, %c0_63] : memref<16x128xf32, #tpu.memory_space<vmem>>, vector<2x128xf32>
    %c0_64 = arith.constant 0 : index
    %c0_65 = arith.constant 0 : index
    %195 = vector.load %arg2[%c0_64, %c0_65] : memref<32x128xf32, #tpu.memory_space<vmem>>, vector<32x128xf32>
    %cst_66 = arith.constant dense<0.000000e+00> : vector<2x128xf32>
    %196 = tpu.matmul %160, %195, %cst_66 {dimension_numbers = #tpu.dot_dimension_numbers<[1], [0], [0], [1], [0, 0, 1, 1], [], []>} : vector<2x32xf32>, vector<32x128xf32>, vector<2x128xf32> -> vector<2x128xf32>
    %197 = arith.addf %194, %196 : vector<2x128xf32>
    %198 = vector.extract_strided_slice %197 {offsets = [0, 0], sizes = [2, 32], strides = [1, 1]} : vector<2x128xf32> to vector<2x32xf32>
    %199 = arith.negf %198 : vector<2x32xf32>
    %200 = math.exp %199 : vector<2x32xf32>
    %cst_67 = arith.constant 1.000000e+00 : f32
    %201 = vector.broadcast %cst_67 : f32 to vector<2x32xf32>
    %202 = arith.addf %201, %200 : vector<2x32xf32>
    %203 = arith.divf %201, %202 : vector<2x32xf32>
    %204 = vector.extract_strided_slice %197 {offsets = [0, 32], sizes = [2, 32], strides = [1, 1]} : vector<2x128xf32> to vector<2x32xf32>
    %205 = arith.negf %204 : vector<2x32xf32>
    %206 = math.exp %205 : vector<2x32xf32>
    %cst_68 = arith.constant 1.000000e+00 : f32
    %207 = vector.broadcast %cst_68 : f32 to vector<2x32xf32>
    %208 = arith.addf %207, %206 : vector<2x32xf32>
    %209 = arith.divf %207, %208 : vector<2x32xf32>
    %210 = vector.extract_strided_slice %197 {offsets = [0, 64], sizes = [2, 32], strides = [1, 1]} : vector<2x128xf32> to vector<2x32xf32>
    %211 = math.tanh %210 : vector<2x32xf32>
    %212 = vector.extract_strided_slice %197 {offsets = [0, 96], sizes = [2, 32], strides = [1, 1]} : vector<2x128xf32> to vector<2x32xf32>
    %213 = arith.negf %212 : vector<2x32xf32>
    %214 = math.exp %213 : vector<2x32xf32>
    %cst_69 = arith.constant 1.000000e+00 : f32
    %215 = vector.broadcast %cst_69 : f32 to vector<2x32xf32>
    %216 = arith.addf %215, %214 : vector<2x32xf32>
    %217 = arith.divf %215, %216 : vector<2x32xf32>
    %218 = arith.mulf %209, %158 : vector<2x32xf32>
    %219 = arith.mulf %203, %211 : vector<2x32xf32>
    %220 = arith.addf %218, %219 : vector<2x32xf32>
    %221 = math.tanh %220 : vector<2x32xf32>
    %222 = arith.mulf %217, %221 : vector<2x32xf32>
    %c0_70 = arith.constant 0 : index
    %c0_71 = arith.constant 0 : index
    %223 = vector.load %arg4[%c0_70, %c0_71] : memref<32x128xf32, #tpu.memory_space<vmem>>, vector<32x128xf32>
    %cst_72 = arith.constant dense<0.000000e+00> : vector<2x128xf32>
    %224 = tpu.matmul %222, %223, %cst_72 {dimension_numbers = #tpu.dot_dimension_numbers<[1], [0], [0], [1], [0, 0, 1, 1], [], []>} : vector<2x32xf32>, vector<32x128xf32>, vector<2x128xf32> -> vector<2x128xf32>
    %c0_73 = arith.constant 0 : index
    %c0_74 = arith.constant 0 : index
    %225 = vector.load %arg5[%c0_73, %c0_74] : memref<32x128xf32, #tpu.memory_space<vmem>>, vector<32x128xf32>
    %cst_75 = arith.constant dense<0.000000e+00> : vector<2x128xf32>
    %226 = tpu.matmul %193, %225, %cst_75 {dimension_numbers = #tpu.dot_dimension_numbers<[1], [0], [0], [1], [0, 0, 1, 1], [], []>} : vector<2x32xf32>, vector<32x128xf32>, vector<2x128xf32> -> vector<2x128xf32>
    %227 = arith.addf %224, %226 : vector<2x128xf32>
    %c0_76 = arith.constant 0 : index
    %c0_77 = arith.constant 0 : index
    %228 = vector.load %arg6[%c0_76, %c0_77] : memref<1x128xf32, #tpu.memory_space<vmem>>, vector<1x128xf32>
    %229 = vector.broadcast %228 : vector<1x128xf32> to vector<2x128xf32>
    %230 = arith.addf %227, %229 : vector<2x128xf32>
    %231 = vector.extract_strided_slice %230 {offsets = [0, 0], sizes = [2, 32], strides = [1, 1]} : vector<2x128xf32> to vector<2x32xf32>
    %232 = arith.negf %231 : vector<2x32xf32>
    %233 = math.exp %232 : vector<2x32xf32>
    %cst_78 = arith.constant 1.000000e+00 : f32
    %234 = vector.broadcast %cst_78 : f32 to vector<2x32xf32>
    %235 = arith.addf %234, %233 : vector<2x32xf32>
    %236 = arith.divf %234, %235 : vector<2x32xf32>
    %237 = vector.extract_strided_slice %230 {offsets = [0, 32], sizes = [2, 32], strides = [1, 1]} : vector<2x128xf32> to vector<2x32xf32>
    %238 = arith.negf %237 : vector<2x32xf32>
    %239 = math.exp %238 : vector<2x32xf32>
    %cst_79 = arith.constant 1.000000e+00 : f32
    %240 = vector.broadcast %cst_79 : f32 to vector<2x32xf32>
    %241 = arith.addf %240, %239 : vector<2x32xf32>
    %242 = arith.divf %240, %241 : vector<2x32xf32>
    %243 = vector.extract_strided_slice %230 {offsets = [0, 64], sizes = [2, 32], strides = [1, 1]} : vector<2x128xf32> to vector<2x32xf32>
    %244 = math.tanh %243 : vector<2x32xf32>
    %245 = vector.extract_strided_slice %230 {offsets = [0, 96], sizes = [2, 32], strides = [1, 1]} : vector<2x128xf32> to vector<2x32xf32>
    %246 = arith.negf %245 : vector<2x32xf32>
    %247 = math.exp %246 : vector<2x32xf32>
    %cst_80 = arith.constant 1.000000e+00 : f32
    %248 = vector.broadcast %cst_80 : f32 to vector<2x32xf32>
    %249 = arith.addf %248, %247 : vector<2x32xf32>
    %250 = arith.divf %248, %249 : vector<2x32xf32>
    %251 = arith.mulf %242, %191 : vector<2x32xf32>
    %252 = arith.mulf %236, %244 : vector<2x32xf32>
    %253 = arith.addf %251, %252 : vector<2x32xf32>
    %254 = math.tanh %253 : vector<2x32xf32>
    %255 = arith.mulf %250, %254 : vector<2x32xf32>
    %c8 = arith.constant 8 : index
    %c0_81 = arith.constant 0 : index
    %256 = vector.load %arg10[%c8, %c0_81] : memref<16x128xf32, #tpu.memory_space<vmem>>, vector<2x128xf32>
    %c0_82 = arith.constant 0 : index
    %c0_83 = arith.constant 0 : index
    %257 = vector.load %arg2[%c0_82, %c0_83] : memref<32x128xf32, #tpu.memory_space<vmem>>, vector<32x128xf32>
    %cst_84 = arith.constant dense<0.000000e+00> : vector<2x128xf32>
    %258 = tpu.matmul %222, %257, %cst_84 {dimension_numbers = #tpu.dot_dimension_numbers<[1], [0], [0], [1], [0, 0, 1, 1], [], []>} : vector<2x32xf32>, vector<32x128xf32>, vector<2x128xf32> -> vector<2x128xf32>
    %259 = arith.addf %256, %258 : vector<2x128xf32>
    %260 = vector.extract_strided_slice %259 {offsets = [0, 0], sizes = [2, 32], strides = [1, 1]} : vector<2x128xf32> to vector<2x32xf32>
    %261 = arith.negf %260 : vector<2x32xf32>
    %262 = math.exp %261 : vector<2x32xf32>
    %cst_85 = arith.constant 1.000000e+00 : f32
    %263 = vector.broadcast %cst_85 : f32 to vector<2x32xf32>
    %264 = arith.addf %263, %262 : vector<2x32xf32>
    %265 = arith.divf %263, %264 : vector<2x32xf32>
    %266 = vector.extract_strided_slice %259 {offsets = [0, 32], sizes = [2, 32], strides = [1, 1]} : vector<2x128xf32> to vector<2x32xf32>
    %267 = arith.negf %266 : vector<2x32xf32>
    %268 = math.exp %267 : vector<2x32xf32>
    %cst_86 = arith.constant 1.000000e+00 : f32
    %269 = vector.broadcast %cst_86 : f32 to vector<2x32xf32>
    %270 = arith.addf %269, %268 : vector<2x32xf32>
    %271 = arith.divf %269, %270 : vector<2x32xf32>
    %272 = vector.extract_strided_slice %259 {offsets = [0, 64], sizes = [2, 32], strides = [1, 1]} : vector<2x128xf32> to vector<2x32xf32>
    %273 = math.tanh %272 : vector<2x32xf32>
    %274 = vector.extract_strided_slice %259 {offsets = [0, 96], sizes = [2, 32], strides = [1, 1]} : vector<2x128xf32> to vector<2x32xf32>
    %275 = arith.negf %274 : vector<2x32xf32>
    %276 = math.exp %275 : vector<2x32xf32>
    %cst_87 = arith.constant 1.000000e+00 : f32
    %277 = vector.broadcast %cst_87 : f32 to vector<2x32xf32>
    %278 = arith.addf %277, %276 : vector<2x32xf32>
    %279 = arith.divf %277, %278 : vector<2x32xf32>
    %280 = arith.mulf %271, %220 : vector<2x32xf32>
    %281 = arith.mulf %265, %273 : vector<2x32xf32>
    %282 = arith.addf %280, %281 : vector<2x32xf32>
    %283 = math.tanh %282 : vector<2x32xf32>
    %284 = arith.mulf %279, %283 : vector<2x32xf32>
    %c0_88 = arith.constant 0 : index
    %c0_89 = arith.constant 0 : index
    %285 = vector.load %arg4[%c0_88, %c0_89] : memref<32x128xf32, #tpu.memory_space<vmem>>, vector<32x128xf32>
    %cst_90 = arith.constant dense<0.000000e+00> : vector<2x128xf32>
    %286 = tpu.matmul %284, %285, %cst_90 {dimension_numbers = #tpu.dot_dimension_numbers<[1], [0], [0], [1], [0, 0, 1, 1], [], []>} : vector<2x32xf32>, vector<32x128xf32>, vector<2x128xf32> -> vector<2x128xf32>
    %c0_91 = arith.constant 0 : index
    %c0_92 = arith.constant 0 : index
    %287 = vector.load %arg5[%c0_91, %c0_92] : memref<32x128xf32, #tpu.memory_space<vmem>>, vector<32x128xf32>
    %cst_93 = arith.constant dense<0.000000e+00> : vector<2x128xf32>
    %288 = tpu.matmul %255, %287, %cst_93 {dimension_numbers = #tpu.dot_dimension_numbers<[1], [0], [0], [1], [0, 0, 1, 1], [], []>} : vector<2x32xf32>, vector<32x128xf32>, vector<2x128xf32> -> vector<2x128xf32>
    %289 = arith.addf %286, %288 : vector<2x128xf32>
    %c0_94 = arith.constant 0 : index
    %c0_95 = arith.constant 0 : index
    %290 = vector.load %arg6[%c0_94, %c0_95] : memref<1x128xf32, #tpu.memory_space<vmem>>, vector<1x128xf32>
    %291 = vector.broadcast %290 : vector<1x128xf32> to vector<2x128xf32>
    %292 = arith.addf %289, %291 : vector<2x128xf32>
    %293 = vector.extract_strided_slice %292 {offsets = [0, 0], sizes = [2, 32], strides = [1, 1]} : vector<2x128xf32> to vector<2x32xf32>
    %294 = arith.negf %293 : vector<2x32xf32>
    %295 = math.exp %294 : vector<2x32xf32>
    %cst_96 = arith.constant 1.000000e+00 : f32
    %296 = vector.broadcast %cst_96 : f32 to vector<2x32xf32>
    %297 = arith.addf %296, %295 : vector<2x32xf32>
    %298 = arith.divf %296, %297 : vector<2x32xf32>
    %299 = vector.extract_strided_slice %292 {offsets = [0, 32], sizes = [2, 32], strides = [1, 1]} : vector<2x128xf32> to vector<2x32xf32>
    %300 = arith.negf %299 : vector<2x32xf32>
    %301 = math.exp %300 : vector<2x32xf32>
    %cst_97 = arith.constant 1.000000e+00 : f32
    %302 = vector.broadcast %cst_97 : f32 to vector<2x32xf32>
    %303 = arith.addf %302, %301 : vector<2x32xf32>
    %304 = arith.divf %302, %303 : vector<2x32xf32>
    %305 = vector.extract_strided_slice %292 {offsets = [0, 64], sizes = [2, 32], strides = [1, 1]} : vector<2x128xf32> to vector<2x32xf32>
    %306 = math.tanh %305 : vector<2x32xf32>
    %307 = vector.extract_strided_slice %292 {offsets = [0, 96], sizes = [2, 32], strides = [1, 1]} : vector<2x128xf32> to vector<2x32xf32>
    %308 = arith.negf %307 : vector<2x32xf32>
    %309 = math.exp %308 : vector<2x32xf32>
    %cst_98 = arith.constant 1.000000e+00 : f32
    %310 = vector.broadcast %cst_98 : f32 to vector<2x32xf32>
    %311 = arith.addf %310, %309 : vector<2x32xf32>
    %312 = arith.divf %310, %311 : vector<2x32xf32>
    %313 = arith.mulf %304, %253 : vector<2x32xf32>
    %314 = arith.mulf %298, %306 : vector<2x32xf32>
    %315 = arith.addf %313, %314 : vector<2x32xf32>
    %316 = math.tanh %315 : vector<2x32xf32>
    %317 = arith.mulf %312, %316 : vector<2x32xf32>
    %c10 = arith.constant 10 : index
    %c0_99 = arith.constant 0 : index
    %318 = vector.load %arg10[%c10, %c0_99] : memref<16x128xf32, #tpu.memory_space<vmem>>, vector<2x128xf32>
    %c0_100 = arith.constant 0 : index
    %c0_101 = arith.constant 0 : index
    %319 = vector.load %arg2[%c0_100, %c0_101] : memref<32x128xf32, #tpu.memory_space<vmem>>, vector<32x128xf32>
    %cst_102 = arith.constant dense<0.000000e+00> : vector<2x128xf32>
    %320 = tpu.matmul %284, %319, %cst_102 {dimension_numbers = #tpu.dot_dimension_numbers<[1], [0], [0], [1], [0, 0, 1, 1], [], []>} : vector<2x32xf32>, vector<32x128xf32>, vector<2x128xf32> -> vector<2x128xf32>
    %321 = arith.addf %318, %320 : vector<2x128xf32>
    %322 = vector.extract_strided_slice %321 {offsets = [0, 0], sizes = [2, 32], strides = [1, 1]} : vector<2x128xf32> to vector<2x32xf32>
    %323 = arith.negf %322 : vector<2x32xf32>
    %324 = math.exp %323 : vector<2x32xf32>
    %cst_103 = arith.constant 1.000000e+00 : f32
    %325 = vector.broadcast %cst_103 : f32 to vector<2x32xf32>
    %326 = arith.addf %325, %324 : vector<2x32xf32>
    %327 = arith.divf %325, %326 : vector<2x32xf32>
    %328 = vector.extract_strided_slice %321 {offsets = [0, 32], sizes = [2, 32], strides = [1, 1]} : vector<2x128xf32> to vector<2x32xf32>
    %329 = arith.negf %328 : vector<2x32xf32>
    %330 = math.exp %329 : vector<2x32xf32>
    %cst_104 = arith.constant 1.000000e+00 : f32
    %331 = vector.broadcast %cst_104 : f32 to vector<2x32xf32>
    %332 = arith.addf %331, %330 : vector<2x32xf32>
    %333 = arith.divf %331, %332 : vector<2x32xf32>
    %334 = vector.extract_strided_slice %321 {offsets = [0, 64], sizes = [2, 32], strides = [1, 1]} : vector<2x128xf32> to vector<2x32xf32>
    %335 = math.tanh %334 : vector<2x32xf32>
    %336 = vector.extract_strided_slice %321 {offsets = [0, 96], sizes = [2, 32], strides = [1, 1]} : vector<2x128xf32> to vector<2x32xf32>
    %337 = arith.negf %336 : vector<2x32xf32>
    %338 = math.exp %337 : vector<2x32xf32>
    %cst_105 = arith.constant 1.000000e+00 : f32
    %339 = vector.broadcast %cst_105 : f32 to vector<2x32xf32>
    %340 = arith.addf %339, %338 : vector<2x32xf32>
    %341 = arith.divf %339, %340 : vector<2x32xf32>
    %342 = arith.mulf %333, %282 : vector<2x32xf32>
    %343 = arith.mulf %327, %335 : vector<2x32xf32>
    %344 = arith.addf %342, %343 : vector<2x32xf32>
    %345 = math.tanh %344 : vector<2x32xf32>
    %346 = arith.mulf %341, %345 : vector<2x32xf32>
    %c0_106 = arith.constant 0 : index
    %c0_107 = arith.constant 0 : index
    %347 = vector.load %arg4[%c0_106, %c0_107] : memref<32x128xf32, #tpu.memory_space<vmem>>, vector<32x128xf32>
    %cst_108 = arith.constant dense<0.000000e+00> : vector<2x128xf32>
    %348 = tpu.matmul %346, %347, %cst_108 {dimension_numbers = #tpu.dot_dimension_numbers<[1], [0], [0], [1], [0, 0, 1, 1], [], []>} : vector<2x32xf32>, vector<32x128xf32>, vector<2x128xf32> -> vector<2x128xf32>
    %c0_109 = arith.constant 0 : index
    %c0_110 = arith.constant 0 : index
    %349 = vector.load %arg5[%c0_109, %c0_110] : memref<32x128xf32, #tpu.memory_space<vmem>>, vector<32x128xf32>
    %cst_111 = arith.constant dense<0.000000e+00> : vector<2x128xf32>
    %350 = tpu.matmul %317, %349, %cst_111 {dimension_numbers = #tpu.dot_dimension_numbers<[1], [0], [0], [1], [0, 0, 1, 1], [], []>} : vector<2x32xf32>, vector<32x128xf32>, vector<2x128xf32> -> vector<2x128xf32>
    %351 = arith.addf %348, %350 : vector<2x128xf32>
    %c0_112 = arith.constant 0 : index
    %c0_113 = arith.constant 0 : index
    %352 = vector.load %arg6[%c0_112, %c0_113] : memref<1x128xf32, #tpu.memory_space<vmem>>, vector<1x128xf32>
    %353 = vector.broadcast %352 : vector<1x128xf32> to vector<2x128xf32>
    %354 = arith.addf %351, %353 : vector<2x128xf32>
    %355 = vector.extract_strided_slice %354 {offsets = [0, 0], sizes = [2, 32], strides = [1, 1]} : vector<2x128xf32> to vector<2x32xf32>
    %356 = arith.negf %355 : vector<2x32xf32>
    %357 = math.exp %356 : vector<2x32xf32>
    %cst_114 = arith.constant 1.000000e+00 : f32
    %358 = vector.broadcast %cst_114 : f32 to vector<2x32xf32>
    %359 = arith.addf %358, %357 : vector<2x32xf32>
    %360 = arith.divf %358, %359 : vector<2x32xf32>
    %361 = vector.extract_strided_slice %354 {offsets = [0, 32], sizes = [2, 32], strides = [1, 1]} : vector<2x128xf32> to vector<2x32xf32>
    %362 = arith.negf %361 : vector<2x32xf32>
    %363 = math.exp %362 : vector<2x32xf32>
    %cst_115 = arith.constant 1.000000e+00 : f32
    %364 = vector.broadcast %cst_115 : f32 to vector<2x32xf32>
    %365 = arith.addf %364, %363 : vector<2x32xf32>
    %366 = arith.divf %364, %365 : vector<2x32xf32>
    %367 = vector.extract_strided_slice %354 {offsets = [0, 64], sizes = [2, 32], strides = [1, 1]} : vector<2x128xf32> to vector<2x32xf32>
    %368 = math.tanh %367 : vector<2x32xf32>
    %369 = vector.extract_strided_slice %354 {offsets = [0, 96], sizes = [2, 32], strides = [1, 1]} : vector<2x128xf32> to vector<2x32xf32>
    %370 = arith.negf %369 : vector<2x32xf32>
    %371 = math.exp %370 : vector<2x32xf32>
    %cst_116 = arith.constant 1.000000e+00 : f32
    %372 = vector.broadcast %cst_116 : f32 to vector<2x32xf32>
    %373 = arith.addf %372, %371 : vector<2x32xf32>
    %374 = arith.divf %372, %373 : vector<2x32xf32>
    %375 = arith.mulf %366, %315 : vector<2x32xf32>
    %376 = arith.mulf %360, %368 : vector<2x32xf32>
    %377 = arith.addf %375, %376 : vector<2x32xf32>
    %378 = math.tanh %377 : vector<2x32xf32>
    %379 = arith.mulf %374, %378 : vector<2x32xf32>
    %c12 = arith.constant 12 : index
    %c0_117 = arith.constant 0 : index
    %380 = vector.load %arg10[%c12, %c0_117] : memref<16x128xf32, #tpu.memory_space<vmem>>, vector<2x128xf32>
    %c0_118 = arith.constant 0 : index
    %c0_119 = arith.constant 0 : index
    %381 = vector.load %arg2[%c0_118, %c0_119] : memref<32x128xf32, #tpu.memory_space<vmem>>, vector<32x128xf32>
    %cst_120 = arith.constant dense<0.000000e+00> : vector<2x128xf32>
    %382 = tpu.matmul %346, %381, %cst_120 {dimension_numbers = #tpu.dot_dimension_numbers<[1], [0], [0], [1], [0, 0, 1, 1], [], []>} : vector<2x32xf32>, vector<32x128xf32>, vector<2x128xf32> -> vector<2x128xf32>
    %383 = arith.addf %380, %382 : vector<2x128xf32>
    %384 = vector.extract_strided_slice %383 {offsets = [0, 0], sizes = [2, 32], strides = [1, 1]} : vector<2x128xf32> to vector<2x32xf32>
    %385 = arith.negf %384 : vector<2x32xf32>
    %386 = math.exp %385 : vector<2x32xf32>
    %cst_121 = arith.constant 1.000000e+00 : f32
    %387 = vector.broadcast %cst_121 : f32 to vector<2x32xf32>
    %388 = arith.addf %387, %386 : vector<2x32xf32>
    %389 = arith.divf %387, %388 : vector<2x32xf32>
    %390 = vector.extract_strided_slice %383 {offsets = [0, 32], sizes = [2, 32], strides = [1, 1]} : vector<2x128xf32> to vector<2x32xf32>
    %391 = arith.negf %390 : vector<2x32xf32>
    %392 = math.exp %391 : vector<2x32xf32>
    %cst_122 = arith.constant 1.000000e+00 : f32
    %393 = vector.broadcast %cst_122 : f32 to vector<2x32xf32>
    %394 = arith.addf %393, %392 : vector<2x32xf32>
    %395 = arith.divf %393, %394 : vector<2x32xf32>
    %396 = vector.extract_strided_slice %383 {offsets = [0, 64], sizes = [2, 32], strides = [1, 1]} : vector<2x128xf32> to vector<2x32xf32>
    %397 = math.tanh %396 : vector<2x32xf32>
    %398 = vector.extract_strided_slice %383 {offsets = [0, 96], sizes = [2, 32], strides = [1, 1]} : vector<2x128xf32> to vector<2x32xf32>
    %399 = arith.negf %398 : vector<2x32xf32>
    %400 = math.exp %399 : vector<2x32xf32>
    %cst_123 = arith.constant 1.000000e+00 : f32
    %401 = vector.broadcast %cst_123 : f32 to vector<2x32xf32>
    %402 = arith.addf %401, %400 : vector<2x32xf32>
    %403 = arith.divf %401, %402 : vector<2x32xf32>
    %404 = arith.mulf %395, %344 : vector<2x32xf32>
    %405 = arith.mulf %389, %397 : vector<2x32xf32>
    %406 = arith.addf %404, %405 : vector<2x32xf32>
    %407 = math.tanh %406 : vector<2x32xf32>
    %408 = arith.mulf %403, %407 : vector<2x32xf32>
    %c0_124 = arith.constant 0 : index
    %c0_125 = arith.constant 0 : index
    %409 = vector.load %arg4[%c0_124, %c0_125] : memref<32x128xf32, #tpu.memory_space<vmem>>, vector<32x128xf32>
    %cst_126 = arith.constant dense<0.000000e+00> : vector<2x128xf32>
    %410 = tpu.matmul %408, %409, %cst_126 {dimension_numbers = #tpu.dot_dimension_numbers<[1], [0], [0], [1], [0, 0, 1, 1], [], []>} : vector<2x32xf32>, vector<32x128xf32>, vector<2x128xf32> -> vector<2x128xf32>
    %c0_127 = arith.constant 0 : index
    %c0_128 = arith.constant 0 : index
    %411 = vector.load %arg5[%c0_127, %c0_128] : memref<32x128xf32, #tpu.memory_space<vmem>>, vector<32x128xf32>
    %cst_129 = arith.constant dense<0.000000e+00> : vector<2x128xf32>
    %412 = tpu.matmul %379, %411, %cst_129 {dimension_numbers = #tpu.dot_dimension_numbers<[1], [0], [0], [1], [0, 0, 1, 1], [], []>} : vector<2x32xf32>, vector<32x128xf32>, vector<2x128xf32> -> vector<2x128xf32>
    %413 = arith.addf %410, %412 : vector<2x128xf32>
    %c0_130 = arith.constant 0 : index
    %c0_131 = arith.constant 0 : index
    %414 = vector.load %arg6[%c0_130, %c0_131] : memref<1x128xf32, #tpu.memory_space<vmem>>, vector<1x128xf32>
    %415 = vector.broadcast %414 : vector<1x128xf32> to vector<2x128xf32>
    %416 = arith.addf %413, %415 : vector<2x128xf32>
    %417 = vector.extract_strided_slice %416 {offsets = [0, 0], sizes = [2, 32], strides = [1, 1]} : vector<2x128xf32> to vector<2x32xf32>
    %418 = arith.negf %417 : vector<2x32xf32>
    %419 = math.exp %418 : vector<2x32xf32>
    %cst_132 = arith.constant 1.000000e+00 : f32
    %420 = vector.broadcast %cst_132 : f32 to vector<2x32xf32>
    %421 = arith.addf %420, %419 : vector<2x32xf32>
    %422 = arith.divf %420, %421 : vector<2x32xf32>
    %423 = vector.extract_strided_slice %416 {offsets = [0, 32], sizes = [2, 32], strides = [1, 1]} : vector<2x128xf32> to vector<2x32xf32>
    %424 = arith.negf %423 : vector<2x32xf32>
    %425 = math.exp %424 : vector<2x32xf32>
    %cst_133 = arith.constant 1.000000e+00 : f32
    %426 = vector.broadcast %cst_133 : f32 to vector<2x32xf32>
    %427 = arith.addf %426, %425 : vector<2x32xf32>
    %428 = arith.divf %426, %427 : vector<2x32xf32>
    %429 = vector.extract_strided_slice %416 {offsets = [0, 64], sizes = [2, 32], strides = [1, 1]} : vector<2x128xf32> to vector<2x32xf32>
    %430 = math.tanh %429 : vector<2x32xf32>
    %431 = vector.extract_strided_slice %416 {offsets = [0, 96], sizes = [2, 32], strides = [1, 1]} : vector<2x128xf32> to vector<2x32xf32>
    %432 = arith.negf %431 : vector<2x32xf32>
    %433 = math.exp %432 : vector<2x32xf32>
    %cst_134 = arith.constant 1.000000e+00 : f32
    %434 = vector.broadcast %cst_134 : f32 to vector<2x32xf32>
    %435 = arith.addf %434, %433 : vector<2x32xf32>
    %436 = arith.divf %434, %435 : vector<2x32xf32>
    %437 = arith.mulf %428, %377 : vector<2x32xf32>
    %438 = arith.mulf %422, %430 : vector<2x32xf32>
    %439 = arith.addf %437, %438 : vector<2x32xf32>
    %440 = math.tanh %439 : vector<2x32xf32>
    %441 = arith.mulf %436, %440 : vector<2x32xf32>
    %c14 = arith.constant 14 : index
    %c0_135 = arith.constant 0 : index
    %442 = vector.load %arg10[%c14, %c0_135] : memref<16x128xf32, #tpu.memory_space<vmem>>, vector<2x128xf32>
    %c0_136 = arith.constant 0 : index
    %c0_137 = arith.constant 0 : index
    %443 = vector.load %arg2[%c0_136, %c0_137] : memref<32x128xf32, #tpu.memory_space<vmem>>, vector<32x128xf32>
    %cst_138 = arith.constant dense<0.000000e+00> : vector<2x128xf32>
    %444 = tpu.matmul %408, %443, %cst_138 {dimension_numbers = #tpu.dot_dimension_numbers<[1], [0], [0], [1], [0, 0, 1, 1], [], []>} : vector<2x32xf32>, vector<32x128xf32>, vector<2x128xf32> -> vector<2x128xf32>
    %445 = arith.addf %442, %444 : vector<2x128xf32>
    %446 = vector.extract_strided_slice %445 {offsets = [0, 0], sizes = [2, 32], strides = [1, 1]} : vector<2x128xf32> to vector<2x32xf32>
    %447 = arith.negf %446 : vector<2x32xf32>
    %448 = math.exp %447 : vector<2x32xf32>
    %cst_139 = arith.constant 1.000000e+00 : f32
    %449 = vector.broadcast %cst_139 : f32 to vector<2x32xf32>
    %450 = arith.addf %449, %448 : vector<2x32xf32>
    %451 = arith.divf %449, %450 : vector<2x32xf32>
    %452 = vector.extract_strided_slice %445 {offsets = [0, 32], sizes = [2, 32], strides = [1, 1]} : vector<2x128xf32> to vector<2x32xf32>
    %453 = arith.negf %452 : vector<2x32xf32>
    %454 = math.exp %453 : vector<2x32xf32>
    %cst_140 = arith.constant 1.000000e+00 : f32
    %455 = vector.broadcast %cst_140 : f32 to vector<2x32xf32>
    %456 = arith.addf %455, %454 : vector<2x32xf32>
    %457 = arith.divf %455, %456 : vector<2x32xf32>
    %458 = vector.extract_strided_slice %445 {offsets = [0, 64], sizes = [2, 32], strides = [1, 1]} : vector<2x128xf32> to vector<2x32xf32>
    %459 = math.tanh %458 : vector<2x32xf32>
    %460 = vector.extract_strided_slice %445 {offsets = [0, 96], sizes = [2, 32], strides = [1, 1]} : vector<2x128xf32> to vector<2x32xf32>
    %461 = arith.negf %460 : vector<2x32xf32>
    %462 = math.exp %461 : vector<2x32xf32>
    %cst_141 = arith.constant 1.000000e+00 : f32
    %463 = vector.broadcast %cst_141 : f32 to vector<2x32xf32>
    %464 = arith.addf %463, %462 : vector<2x32xf32>
    %465 = arith.divf %463, %464 : vector<2x32xf32>
    %466 = arith.mulf %457, %406 : vector<2x32xf32>
    %467 = arith.mulf %451, %459 : vector<2x32xf32>
    %468 = arith.addf %466, %467 : vector<2x32xf32>
    %469 = math.tanh %468 : vector<2x32xf32>
    %470 = arith.mulf %465, %469 : vector<2x32xf32>
    %c0_142 = arith.constant 0 : index
    %c0_143 = arith.constant 0 : index
    %471 = vector.load %arg4[%c0_142, %c0_143] : memref<32x128xf32, #tpu.memory_space<vmem>>, vector<32x128xf32>
    %cst_144 = arith.constant dense<0.000000e+00> : vector<2x128xf32>
    %472 = tpu.matmul %470, %471, %cst_144 {dimension_numbers = #tpu.dot_dimension_numbers<[1], [0], [0], [1], [0, 0, 1, 1], [], []>} : vector<2x32xf32>, vector<32x128xf32>, vector<2x128xf32> -> vector<2x128xf32>
    %c0_145 = arith.constant 0 : index
    %c0_146 = arith.constant 0 : index
    %473 = vector.load %arg5[%c0_145, %c0_146] : memref<32x128xf32, #tpu.memory_space<vmem>>, vector<32x128xf32>
    %cst_147 = arith.constant dense<0.000000e+00> : vector<2x128xf32>
    %474 = tpu.matmul %441, %473, %cst_147 {dimension_numbers = #tpu.dot_dimension_numbers<[1], [0], [0], [1], [0, 0, 1, 1], [], []>} : vector<2x32xf32>, vector<32x128xf32>, vector<2x128xf32> -> vector<2x128xf32>
    %475 = arith.addf %472, %474 : vector<2x128xf32>
    %c0_148 = arith.constant 0 : index
    %c0_149 = arith.constant 0 : index
    %476 = vector.load %arg6[%c0_148, %c0_149] : memref<1x128xf32, #tpu.memory_space<vmem>>, vector<1x128xf32>
    %477 = vector.broadcast %476 : vector<1x128xf32> to vector<2x128xf32>
    %478 = arith.addf %475, %477 : vector<2x128xf32>
    %479 = vector.extract_strided_slice %478 {offsets = [0, 0], sizes = [2, 32], strides = [1, 1]} : vector<2x128xf32> to vector<2x32xf32>
    %480 = arith.negf %479 : vector<2x32xf32>
    %481 = math.exp %480 : vector<2x32xf32>
    %cst_150 = arith.constant 1.000000e+00 : f32
    %482 = vector.broadcast %cst_150 : f32 to vector<2x32xf32>
    %483 = arith.addf %482, %481 : vector<2x32xf32>
    %484 = arith.divf %482, %483 : vector<2x32xf32>
    %485 = vector.extract_strided_slice %478 {offsets = [0, 32], sizes = [2, 32], strides = [1, 1]} : vector<2x128xf32> to vector<2x32xf32>
    %486 = arith.negf %485 : vector<2x32xf32>
    %487 = math.exp %486 : vector<2x32xf32>
    %cst_151 = arith.constant 1.000000e+00 : f32
    %488 = vector.broadcast %cst_151 : f32 to vector<2x32xf32>
    %489 = arith.addf %488, %487 : vector<2x32xf32>
    %490 = arith.divf %488, %489 : vector<2x32xf32>
    %491 = vector.extract_strided_slice %478 {offsets = [0, 64], sizes = [2, 32], strides = [1, 1]} : vector<2x128xf32> to vector<2x32xf32>
    %492 = math.tanh %491 : vector<2x32xf32>
    %493 = vector.extract_strided_slice %478 {offsets = [0, 96], sizes = [2, 32], strides = [1, 1]} : vector<2x128xf32> to vector<2x32xf32>
    %494 = arith.negf %493 : vector<2x32xf32>
    %495 = math.exp %494 : vector<2x32xf32>
    %cst_152 = arith.constant 1.000000e+00 : f32
    %496 = vector.broadcast %cst_152 : f32 to vector<2x32xf32>
    %497 = arith.addf %496, %495 : vector<2x32xf32>
    %498 = arith.divf %496, %497 : vector<2x32xf32>
    %499 = arith.mulf %490, %439 : vector<2x32xf32>
    %500 = arith.mulf %484, %492 : vector<2x32xf32>
    %501 = arith.addf %499, %500 : vector<2x32xf32>
    %502 = math.tanh %501 : vector<2x32xf32>
    %503 = arith.mulf %498, %502 : vector<2x32xf32>
    %c0_153 = arith.constant 0 : index
    %c0_154 = arith.constant 0 : index
    %504 = vector.load %arg7[%c0_153, %c0_154] : memref<32x4xf32, #tpu.memory_space<vmem>>, vector<32x4xf32>
    %cst_155 = arith.constant dense<0.000000e+00> : vector<2x4xf32>
    %505 = tpu.matmul %503, %504, %cst_155 {dimension_numbers = #tpu.dot_dimension_numbers<[1], [0], [0], [1], [0, 0, 1, 1], [], []>} : vector<2x32xf32>, vector<32x4xf32>, vector<2x4xf32> -> vector<2x4xf32>
    %c0_156 = arith.constant 0 : index
    %c0_157 = arith.constant 0 : index
    %506 = vector.load %arg8[%c0_156, %c0_157] : memref<1x4xf32, #tpu.memory_space<vmem>>, vector<1x4xf32>
    %507 = vector.broadcast %506 : vector<1x4xf32> to vector<2x4xf32>
    %508 = arith.addf %505, %507 : vector<2x4xf32>
    %c0_158 = arith.constant 0 : index
    %c0_159 = arith.constant 0 : index
    %509 = vector.load %arg9[%c0_158, %c0_159] : memref<2x4xf32, #tpu.memory_space<vmem>>, vector<2x4xf32>
    tpu.vector_store %arg9[%c0_158, %c0_159], %508 {strides = array<i32>} : memref<2x4xf32, #tpu.memory_space<vmem>>, vector<2x4xf32>,
    return
  }
}

</mosaic_0001>

<llo_original>
// kernel: lstm_model_forward.1
$region0: #{lstm_model_forward.1}
  #allocation0 [shape = 'u32[]', space=smem, size = 0x4, offset = 0x4, fixed_abs, tag = 'smem constant byte address 0x4 - core index']
  #allocation1 [shape = 'u32[72,128]{1,0:T(1,128)}', space=vmem, size = 0x9000, scoped, tag = 'internal scratch']
  #allocation2 [shape = 'f32[16,128]{1,0:T(8,128)}', space=vmem, size = 0x2000, scoped, tag = 'scratch operand']
  %s0 = inlined_call_operand.vmem [shape: f32[16,16], index: 0, kind: input, shape index: {}]
  %s1 = inlined_call_operand.hbm [shape: f32[16,128], index: 1, kind: input, shape index: {}]
  %s2 = inlined_call_operand.vmem [shape: f32[32,128], index: 2, kind: input, shape index: {}]
  %s3 = inlined_call_operand.vmem [shape: f32[1,128], index: 3, kind: input, shape index: {}]
  %s4 = inlined_call_operand.vmem [shape: f32[32,128], index: 4, kind: input, shape index: {}]
  %s5 = inlined_call_operand.hbm [shape: f32[32,128], index: 5, kind: input, shape index: {}]
  %s6 = inlined_call_operand.vmem [shape: f32[1,128], index: 6, kind: input, shape index: {}]
  %s7 = inlined_call_operand.vmem [shape: f32[32,4], index: 7, kind: input, shape index: {}]
  %s8 = inlined_call_operand.vmem [shape: f32[1,4], index: 8, kind: input, shape index: {}]
  %s9 = inlined_call_operand.hbm [shape: f32[2,4], index: 9, kind: output, shape index: {}]
  %s10 = sld [smem:[#allocation0]]
  $region54: #{lstm_model_forward.1} parent=0
    _
  %s12 = ssub.s32 1, %s10
  %s13 = scalar_select 0, %s12, %s10
  $region1: #{lstm_model_forward.1} parent=0
    #allocation3 [shape = 'u8[8192]{0}', space=vmem, size = 0x2000, scoped, tag = 'input window, operand 1, single buffered']
    #allocation4 [shape = 's32[1]{0}', space=sflag, size = 0x4, scoped, tag = 'scoped memory for lstm_model_forward.1']
    #allocation5 [shape = 's32[1]{0}', space=sflag, size = 0x4, scoped, tag = 'scoped memory for lstm_model_forward.1']
    #allocation6 [shape = 'u8[16384]{0}', space=vmem, size = 0x4000, scoped, tag = 'input window, operand 5, single buffered']
    #allocation7 [shape = 's32[1]{0}', space=sflag, size = 0x4, scoped, tag = 'scoped memory for lstm_model_forward.1']
    #allocation8 [shape = 'u8[1024]{0}', space=vmem, size = 0x400, scoped, tag = 'output window, operand 0, single buffered']
    %14 = vsyncpa [#allocation4], 0
    %15 = vsyncpa [#allocation7], 0
    %16 = vsyncpa [#allocation5], 0
    // Predicated region
    $region2: #{lstm_model_forward.1} parent=1 // pred_check
      _
    $region3: #{lstm_model_forward.1} parent=1 // pred_check_branch
      %18 = sbr.rel (0) target = $region5
    $region4: #{lstm_model_forward.1} parent=1 // pred_region
      _
    $region5: #{lstm_model_forward.1} parent=1 // pred_fallthru
      _
    // Predicated region
    $region6: #{lstm_model_forward.1} parent=1 // pred_check
      _
    $region7: #{lstm_model_forward.1} parent=1 // pred_check_branch
      %20 = sbr.rel (0) target = $region9
    $region8: #{lstm_model_forward.1} parent=1 // pred_region
      %22 = vsyncadd [#allocation4], 0
      %s23 = sshll.u32 %s1, 4
      %s24 = int_to_ptr.hbm [resolvable:$true] %s23
      %s25 = sshll.u32 [#allocation3], 4
      %s26 = int_to_ptr.vmem [resolvable:$true] %s25
      %31 = dma.hbm_to_vmem [thread:$0]  %s24, 256, %s26, [#allocation4], 128, 128, 8
    $region9: #{lstm_model_forward.1} parent=1 // pred_fallthru
      _
    // Predicated region
    $region10: #{lstm_model_forward.1} parent=1 // pred_check
      _
    $region11: #{lstm_model_forward.1} parent=1 // pred_check_branch
      %33 = sbr.rel (0) target = $region13
    $region12: #{lstm_model_forward.1} parent=1 // pred_region
      _
    $region13: #{lstm_model_forward.1} parent=1 // pred_fallthru
      _
    // Predicated region
    $region14: #{lstm_model_forward.1} parent=1 // pred_check
      _
    $region15: #{lstm_model_forward.1} parent=1 // pred_check_branch
      %35 = sbr.rel (0) target = $region17
    $region16: #{lstm_model_forward.1} parent=1 // pred_region
      _
    $region17: #{lstm_model_forward.1} parent=1 // pred_fallthru
      _
    // Predicated region
    $region18: #{lstm_model_forward.1} parent=1 // pred_check
      _
    $region19: #{lstm_model_forward.1} parent=1 // pred_check_branch
      %37 = sbr.rel (0) target = $region21
    $region20: #{lstm_model_forward.1} parent=1 // pred_region
      _
    $region21: #{lstm_model_forward.1} parent=1 // pred_fallthru
      _
    // Predicated region
    $region22: #{lstm_model_forward.1} parent=1 // pred_check
      _
    $region23: #{lstm_model_forward.1} parent=1 // pred_check_branch
      %39 = sbr.rel (0) target = $region25
    $region24: #{lstm_model_forward.1} parent=1 // pred_region
      %41 = vsyncadd [#allocation7], 0
      %s42 = sshll.u32 %s5, 4
      %s43 = int_to_ptr.hbm [resolvable:$true] %s42
      %s44 = sshll.u32 [#allocation6], 4
      %s45 = int_to_ptr.vmem [resolvable:$true] %s44
      %50 = dma.hbm_to_vmem [thread:$0]  %s43, 512, %s45, [#allocation7], 128, 128, 8
    $region25: #{lstm_model_forward.1} parent=1 // pred_fallthru
      _
    // Predicated region
    $region26: #{lstm_model_forward.1} parent=1 // pred_check
      _
    $region27: #{lstm_model_forward.1} parent=1 // pred_check_branch
      %52 = sbr.rel (0) target = $region29
    $region28: #{lstm_model_forward.1} parent=1 // pred_region
      _
    $region29: #{lstm_model_forward.1} parent=1 // pred_fallthru
      _
    // Predicated region
    $region30: #{lstm_model_forward.1} parent=1 // pred_check
      _
    $region31: #{lstm_model_forward.1} parent=1 // pred_check_branch
      %54 = sbr.rel (0) target = $region33
    $region32: #{lstm_model_forward.1} parent=1 // pred_region
      _
    $region33: #{lstm_model_forward.1} parent=1 // pred_fallthru
      _
    // Predicated region
    $region34: #{lstm_model_forward.1} parent=1 // pred_check
      _
    $region35: #{lstm_model_forward.1} parent=1 // pred_check_branch
      %56 = sbr.rel (0) target = $region37
    $region36: #{lstm_model_forward.1} parent=1 // pred_region
      _
    $region37: #{lstm_model_forward.1} parent=1 // pred_fallthru
      _
    // Predicated region
    $region38: #{lstm_model_forward.1} parent=1 // pred_check
      _
    $region39: #{lstm_model_forward.1} parent=1 // pred_check_branch
      %58 = sbr.rel (0) target = $region41
    $region40: #{lstm_model_forward.1} parent=1 // pred_region
      %60 = dma.done [#allocation4], 256
    $region41: #{lstm_model_forward.1} parent=1 // pred_fallthru
      _
    // Predicated region
    $region42: #{lstm_model_forward.1} parent=1 // pred_check
      _
    $region43: #{lstm_model_forward.1} parent=1 // pred_check_branch
      %62 = sbr.rel (0) target = $region45
    $region44: #{lstm_model_forward.1} parent=1 // pred_region
      %64 = dma.done [#allocation7], 512
    $region45: #{lstm_model_forward.1} parent=1 // pred_fallthru
      _
    %v65 = vld [vmem:[%s0] sm:$0xff]
    %v66 = vld [vmem:[%s0 + $0x8] sm:$0xff]
    %v67 = vld [vmem:[#allocation3] sm:$0xff]
    %v68 = vld [vmem:[#allocation3 + $0x8] sm:$0xff]
    %v69 = vld [vmem:[%s3] sm:$0x1]
    %v71 = vperm.slane %v69, 0
    %vm73 = vcmask 130048
    %v75 = vsel %vm73, %v65, 0
    %v78 = vsel %vm73, %v66, 0
    %80 = vmatpush.msra.mxu0 0.0
    %81 = vmatpush.msra.mxu0 0.0
    %82 = vmatpush.msra.mxu0 0.0
    %83 = vmatpush.msra.mxu0 0.0
    %84 = vmatpush.msra.mxu0 0.0
    %85 = vmatpush.msra.mxu0 0.0
    %86 = vmatpush.msra.mxu0 0.0
    %87 = vmatpush.msra.mxu0 0.0
    %88 = vmatpush.msra.mxu0 0.0
    %89 = vmatpush.msra.mxu0 0.0
    %90 = vmatpush.msra.mxu0 0.0
    %91 = vmatpush.msra.mxu0 0.0
    %92 = vmatpush.msra.mxu0 0.0
    %93 = vmatpush.msra.mxu0 0.0
    %94 = vmatpush.msra.mxu0 %v68
    %95 = vmatpush.msra.mxu0 %v67
    %96 = vmatmul.f32.gmra.mxu0 %v75
    %v97 = vpop.f32.mrf.mxu0
    %v98 = vadd.f32 %v71, %v97
    %99 = vmatmul.f32.gmra.mxu0 %v78
    %v100 = vpop.f32.mrf.mxu0
    %v101 = vadd.f32 %v71, %v100
    %102 = vdwg.mxu0
    %103 = vst [vmem:[#allocation2] sm:$0xff] %v98
    %104 = vst [vmem:[#allocation2 + $0x8] sm:$0xff] %v101
    %v105 = vld [vmem:[#allocation2] sm:$0x3]
    %v106 = vld [vmem:[%s2] sm:$0xff]
    %v107 = vld [vmem:[%s2 + $0x8] sm:$0xff]
    %v108 = vld [vmem:[%s2 + $0x10] sm:$0xff]
    %v109 = vld [vmem:[%s2 + $0x18] sm:$0xff]
    %vm110 = vcmask 261120
    %v112 = vsel %vm110, 0.0, 0
    %114 = vmatpush.msra.mxu0 0.0
    %115 = vmatpush.msra.mxu0 0.0
    %116 = vmatpush.msra.mxu0 0.0
    %117 = vmatpush.msra.mxu0 0.0
    %118 = vmatpush.msra.mxu0 0.0
    %119 = vmatpush.msra.mxu0 0.0
    %120 = vmatpush.msra.mxu0 0.0
    %121 = vmatpush.msra.mxu0 0.0
    %122 = vmatpush.msra.mxu0 0.0
    %123 = vmatpush.msra.mxu0 0.0
    %124 = vmatpush.msra.mxu0 0.0
    %125 = vmatpush.msra.mxu0 0.0
    %126 = vmatpush.msra.mxu0 %v109
    %127 = vmatpush.msra.mxu0 %v108
    %128 = vmatpush.msra.mxu0 %v107
    %129 = vmatpush.msra.mxu0 %v106
    %130 = vmatmul.f32.gmra.mxu0 %v112
    %v131 = vpop.f32.mrf.mxu0
    %v132 = vadd.f32 0.0, %v131
    %133 = vdwg.mxu0
    %v134 = vadd.f32 %v105, %v132
    %v135 = vxor.u32 %v134, 2147483648
    %v136 = vmul.f32 %v135, 1.442695
    %v137 = vpow.pop %v136
    %v138 = vadd.f32 %v137, 1.0
    %v139 = vrcp.pop %v138
    %v140 = vmul.f32 %v138, %v139
    %v141 = vsub.f32 1.0, %v140
    %v142 = vmul.f32 %v139, %v141
    %v143 = vadd.f32 %v139, %v142
    %vm144 = vweird.f32 %v138
    %vm145 = vweird.f32 %v139
    %vm146 = vmor %vm144, %vm145
    %v147 = vsel %vm146, %v139, %v143
    %v148 = vand.u32 2147483647, %v138
    %vm149 = vcmp.eq.f32.partialorder %v148, 8.507059e+37
    %v150 = vand.u32 %v138, 2147483648
    %v151 = vor.u32 1.1754944e-38, %v150
    %v152 = vsel %vm149, %v151, %v147
    %v153 = vmul.f32 1.0, %v152
    %v154 = vtanh.pop %v134
    %v155 = vmul.f32 %v153, 0.0
    %157 = vrot.lane.b32.xlu0 %v154, 64
    %v158 = vpop.permute.xlu0 %157
    %v160 = vmul.f32 %v153, %v158
    %162 = vrot.lane.b32.xlu0 %v160, 32
    %v163 = vpop.permute.xlu0 %162
    %v165 = vadd.f32 %v155, %v163
    %v166 = vtanh.pop %v165
    %168 = vrot.lane.b32.xlu0 %v166, 64
    %v169 = vpop.permute.xlu0 %168
    %v171 = vmul.f32 %v153, %v169
    %v172 = vld [vmem:[%s4] sm:$0xff]
    %v173 = vld [vmem:[%s4 + $0x8] sm:$0xff]
    %v174 = vld [vmem:[%s4 + $0x10] sm:$0xff]
    %v175 = vld [vmem:[%s4 + $0x18] sm:$0xff]
    %v176 = vld [vmem:[#allocation6] sm:$0xff]
    %v177 = vld [vmem:[#allocation6 + $0x8] sm:$0xff]
    %v178 = vld [vmem:[#allocation6 + $0x10] sm:$0xff]
    %v179 = vld [vmem:[#allocation6 + $0x18] sm:$0xff]
    %180 = vmatpush.msra.mxu0 0.0
    %181 = vmatpush.msra.mxu0 0.0
    %182 = vmatpush.msra.mxu0 0.0
    %183 = vmatpush.msra.mxu0 0.0
    %184 = vmatpush.msra.mxu0 0.0
    %185 = vmatpush.msra.mxu0 0.0
    %186 = vmatpush.msra.mxu0 0.0
    %187 = vmatpush.msra.mxu0 0.0
    %188 = vmatpush.msra.mxu0 0.0
    %189 = vmatpush.msra.mxu0 0.0
    %190 = vmatpush.msra.mxu0 0.0
    %191 = vmatpush.msra.mxu0 0.0
    %192 = vmatpush.msra.mxu0 %v179
    %193 = vmatpush.msra.mxu0 %v178
    %194 = vmatpush.msra.mxu0 %v177
    %195 = vmatpush.msra.mxu0 %v176
    %196 = vmatmul.f32.gmra.mxu0 %v112
    %v197 = vpop.f32.mrf.mxu0
    %v198 = vadd.f32 0.0, %v197
    %199 = vdwg.mxu0
    %201 = vrot.lane.b32.xlu0 %v171, 32
    %v202 = vpop.permute.xlu0 %201
    %v203 = vsel %vm110, %v202, 0
    %205 = vmatpush.msra.mxu0 0.0
    %206 = vmatpush.msra.mxu0 0.0
    %207 = vmatpush.msra.mxu0 0.0
    %208 = vmatpush.msra.mxu0 0.0
    %209 = vmatpush.msra.mxu0 0.0
    %210 = vmatpush.msra.mxu0 0.0
    %211 = vmatpush.msra.mxu0 0.0
    %212 = vmatpush.msra.mxu0 0.0
    %213 = vmatpush.msra.mxu0 0.0
    %214 = vmatpush.msra.mxu0 0.0
    %215 = vmatpush.msra.mxu0 0.0
    %216 = vmatpush.msra.mxu0 0.0
    %217 = vmatpush.msra.mxu0 %v175
    %218 = vmatpush.msra.mxu0 %v174
    %219 = vmatpush.msra.mxu0 %v173
    %220 = vmatpush.msra.mxu0 %v172
    %221 = vmatmul.f32.gmra.mxu0 %v203
    %v222 = vpop.f32.mrf.mxu0
    %v223 = vadd.f32 %v198, %v222
    %224 = vdwg.mxu0
    %v225 = vld [vmem:[%s6] sm:$0x1]
    %v227 = vperm.slane %v225, 0
    %v229 = vadd.f32 %v223, %v227
    %v230 = vxor.u32 %v229, 2147483648
    %v231 = vmul.f32 %v230, 1.442695
    %v232 = vpow.pop %v231
    %v233 = vadd.f32 %v232, 1.0
    %v234 = vrcp.pop %v233
    %v235 = vmul.f32 %v233, %v234
    %v236 = vsub.f32 1.0, %v235
    %v237 = vmul.f32 %v234, %v236
    %v238 = vadd.f32 %v234, %v237
    %vm239 = vweird.f32 %v233
    %vm240 = vweird.f32 %v234
    %vm241 = vmor %vm239, %vm240
    %v242 = vsel %vm241, %v234, %v238
    %v243 = vand.u32 2147483647, %v233
    %vm244 = vcmp.eq.f32.partialorder %v243, 8.507059e+37
    %v245 = vand.u32 %v233, 2147483648
    %v246 = vor.u32 1.1754944e-38, %v245
    %v247 = vsel %vm244, %v246, %v242
    %v248 = vmul.f32 1.0, %v247
    %v249 = vtanh.pop %v229
    %v250 = vmul.f32 %v248, 0.0
    %252 = vrot.lane.b32.xlu0 %v249, 64
    %v253 = vpop.permute.xlu0 %252
    %v255 = vmul.f32 %v248, %v253
    %257 = vrot.lane.b32.xlu0 %v255, 32
    %v258 = vpop.permute.xlu0 %257
    %v260 = vadd.f32 %v250, %v258
    %v261 = vtanh.pop %v260
    %263 = vrot.lane.b32.xlu0 %v261, 64
    %v264 = vpop.permute.xlu0 %263
    %v266 = vmul.f32 %v248, %v264
    %v267 = vld [vmem:[#allocation2 + $0x2] sm:$0x3]
    %268 = vmatpush.msra.mxu0 0.0
    %269 = vmatpush.msra.mxu0 0.0
    %270 = vmatpush.msra.mxu0 0.0
    %271 = vmatpush.msra.mxu0 0.0
    %272 = vmatpush.msra.mxu0 0.0
    %273 = vmatpush.msra.mxu0 0.0
    %274 = vmatpush.msra.mxu0 0.0
    %275 = vmatpush.msra.mxu0 0.0
    %276 = vmatpush.msra.mxu0 0.0
    %277 = vmatpush.msra.mxu0 0.0
    %278 = vmatpush.msra.mxu0 0.0
    %279 = vmatpush.msra.mxu0 0.0
    %280 = vmatpush.msra.mxu0 %v109
    %281 = vmatpush.msra.mxu0 %v108
    %282 = vmatpush.msra.mxu0 %v107
    %283 = vmatpush.msra.mxu0 %v106
    %284 = vmatmul.f32.gmra.mxu0 %v203
    %v285 = vpop.f32.mrf.mxu0
    %v286 = vadd.f32 0.0, %v285
    %287 = vdwg.mxu0
    %v288 = vadd.f32 %v267, %v286
    %v289 = vxor.u32 %v288, 2147483648
    %v290 = vmul.f32 %v289, 1.442695
    %v291 = vpow.pop %v290
    %v292 = vadd.f32 %v291, 1.0
    %v293 = vrcp.pop %v292
    %v294 = vmul.f32 %v292, %v293
    %v295 = vsub.f32 1.0, %v294
    %v296 = vmul.f32 %v293, %v295
    %v297 = vadd.f32 %v293, %v296
    %vm298 = vweird.f32 %v292
    %vm299 = vweird.f32 %v293
    %vm300 = vmor %vm298, %vm299
    %v301 = vsel %vm300, %v293, %v297
    %v302 = vand.u32 2147483647, %v292
    %vm303 = vcmp.eq.f32.partialorder %v302, 8.507059e+37
    %v304 = vand.u32 %v292, 2147483648
    %v305 = vor.u32 1.1754944e-38, %v304
    %v306 = vsel %vm303, %v305, %v301
    %v307 = vmul.f32 1.0, %v306
    %v308 = vtanh.pop %v288
    %v309 = vmul.f32 %v307, %v165
    %311 = vrot.lane.b32.xlu0 %v308, 64
    %v312 = vpop.permute.xlu0 %311
    %v314 = vmul.f32 %v307, %v312
    %316 = vrot.lane.b32.xlu0 %v314, 32
    %v317 = vpop.permute.xlu0 %316
    %v319 = vadd.f32 %v309, %v317
    %v320 = vtanh.pop %v319
    %322 = vrot.lane.b32.xlu0 %v320, 64
    %v323 = vpop.permute.xlu0 %322
    %v325 = vmul.f32 %v307, %v323
    %327 = vrot.lane.b32.xlu0 %v266, 32
    %v328 = vpop.permute.xlu0 %327
    %v329 = vsel %vm110, %v328, 0
    %331 = vmatpush.msra.mxu0 0.0
    %332 = vmatpush.msra.mxu0 0.0
    %333 = vmatpush.msra.mxu0 0.0
    %334 = vmatpush.msra.mxu0 0.0
    %335 = vmatpush.msra.mxu0 0.0
    %336 = vmatpush.msra.mxu0 0.0
    %337 = vmatpush.msra.mxu0 0.0
    %338 = vmatpush.msra.mxu0 0.0
    %339 = vmatpush.msra.mxu0 0.0
    %340 = vmatpush.msra.mxu0 0.0
    %341 = vmatpush.msra.mxu0 0.0
    %342 = vmatpush.msra.mxu0 0.0
    %343 = vmatpush.msra.mxu0 %v179
    %344 = vmatpush.msra.mxu0 %v178
    %345 = vmatpush.msra.mxu0 %v177
    %346 = vmatpush.msra.mxu0 %v176
    %347 = vmatmul.f32.gmra.mxu0 %v329
    %v348 = vpop.f32.mrf.mxu0
    %v349 = vadd.f32 0.0, %v348
    %350 = vdwg.mxu0
    %352 = vrot.lane.b32.xlu0 %v325, 32
    %v353 = vpop.permute.xlu0 %352
    %v354 = vsel %vm110, %v353, 0
    %356 = vmatpush.msra.mxu0 0.0
    %357 = vmatpush.msra.mxu0 0.0
    %358 = vmatpush.msra.mxu0 0.0
    %359 = vmatpush.msra.mxu0 0.0
    %360 = vmatpush.msra.mxu0 0.0
    %361 = vmatpush.msra.mxu0 0.0
    %362 = vmatpush.msra.mxu0 0.0
    %363 = vmatpush.msra.mxu0 0.0
    %364 = vmatpush.msra.mxu0 0.0
    %365 = vmatpush.msra.mxu0 0.0
    %366 = vmatpush.msra.mxu0 0.0
    %367 = vmatpush.msra.mxu0 0.0
    %368 = vmatpush.msra.mxu0 %v175
    %369 = vmatpush.msra.mxu0 %v174
    %370 = vmatpush.msra.mxu0 %v173
    %371 = vmatpush.msra.mxu0 %v172
    %372 = vmatmul.f32.gmra.mxu0 %v354
    %v373 = vpop.f32.mrf.mxu0
    %v374 = vadd.f32 %v349, %v373
    %375 = vdwg.mxu0
    %v376 = vadd.f32 %v374, %v227
    %v377 = vxor.u32 %v376, 2147483648
    %v378 = vmul.f32 %v377, 1.442695
    %v379 = vpow.pop %v378
    %v380 = vadd.f32 %v379, 1.0
    %v381 = vrcp.pop %v380
    %v382 = vmul.f32 %v380, %v381
    %v383 = vsub.f32 1.0, %v382
    %v384 = vmul.f32 %v381, %v383
    %v385 = vadd.f32 %v381, %v384
    %vm386 = vweird.f32 %v380
    %vm387 = vweird.f32 %v381
    %vm388 = vmor %vm386, %vm387
    %v389 = vsel %vm388, %v381, %v385
    %v390 = vand.u32 2147483647, %v380
    %vm391 = vcmp.eq.f32.partialorder %v390, 8.507059e+37
    %v392 = vand.u32 %v380, 2147483648
    %v393 = vor.u32 1.1754944e-38, %v392
    %v394 = vsel %vm391, %v393, %v389
    %v395 = vmul.f32 1.0, %v394
    %v396 = vtanh.pop %v376
    %v397 = vmul.f32 %v395, %v260
    %399 = vrot.lane.b32.xlu0 %v396, 64
    %v400 = vpop.permute.xlu0 %399
    %v402 = vmul.f32 %v395, %v400
    %404 = vrot.lane.b32.xlu0 %v402, 32
    %v405 = vpop.permute.xlu0 %404
    %v407 = vadd.f32 %v397, %v405
    %v408 = vtanh.pop %v407
    %410 = vrot.lane.b32.xlu0 %v408, 64
    %v411 = vpop.permute.xlu0 %410
    %v413 = vmul.f32 %v395, %v411
    %v414 = vld [vmem:[#allocation2 + $0x4] sm:$0x3]
    %415 = vmatpush.msra.mxu0 0.0
    %416 = vmatpush.msra.mxu0 0.0
    %417 = vmatpush.msra.mxu0 0.0
    %418 = vmatpush.msra.mxu0 0.0
    %419 = vmatpush.msra.mxu0 0.0
    %420 = vmatpush.msra.mxu0 0.0
    %421 = vmatpush.msra.mxu0 0.0
    %422 = vmatpush.msra.mxu0 0.0
    %423 = vmatpush.msra.mxu0 0.0
    %424 = vmatpush.msra.mxu0 0.0
    %425 = vmatpush.msra.mxu0 0.0
    %426 = vmatpush.msra.mxu0 0.0
    %427 = vmatpush.msra.mxu0 %v109
    %428 = vmatpush.msra.mxu0 %v108
    %429 = vmatpush.msra.mxu0 %v107
    %430 = vmatpush.msra.mxu0 %v106
    %431 = vmatmul.f32.gmra.mxu0 %v354
    %v432 = vpop.f32.mrf.mxu0
    %v433 = vadd.f32 0.0, %v432
    %434 = vdwg.mxu0
    %v435 = vadd.f32 %v414, %v433
    %v436 = vxor.u32 %v435, 2147483648
    %v437 = vmul.f32 %v436, 1.442695
    %v438 = vpow.pop %v437
    %v439 = vadd.f32 %v438, 1.0
    %v440 = vrcp.pop %v439
    %v441 = vmul.f32 %v439, %v440
    %v442 = vsub.f32 1.0, %v441
    %v443 = vmul.f32 %v440, %v442
    %v444 = vadd.f32 %v440, %v443
    %vm445 = vweird.f32 %v439
    %vm446 = vweird.f32 %v440
    %vm447 = vmor %vm445, %vm446
    %v448 = vsel %vm447, %v440, %v444
    %v449 = vand.u32 2147483647, %v439
    %vm450 = vcmp.eq.f32.partialorder %v449, 8.507059e+37
    %v451 = vand.u32 %v439, 2147483648
    %v452 = vor.u32 1.1754944e-38, %v451
    %v453 = vsel %vm450, %v452, %v448
    %v454 = vmul.f32 1.0, %v453
    %v455 = vtanh.pop %v435
    %v456 = vmul.f32 %v454, %v319
    %458 = vrot.lane.b32.xlu0 %v455, 64
    %v459 = vpop.permute.xlu0 %458
    %v461 = vmul.f32 %v454, %v459
    %463 = vrot.lane.b32.xlu0 %v461, 32
    %v464 = vpop.permute.xlu0 %463
    %v466 = vadd.f32 %v456, %v464
    %v467 = vtanh.pop %v466
    %469 = vrot.lane.b32.xlu0 %v467, 64
    %v470 = vpop.permute.xlu0 %469
    %v472 = vmul.f32 %v454, %v470
    %474 = vrot.lane.b32.xlu0 %v413, 32
    %v475 = vpop.permute.xlu0 %474
    %v476 = vsel %vm110, %v475, 0
    %478 = vmatpush.msra.mxu0 0.0
    %479 = vmatpush.msra.mxu0 0.0
    %480 = vmatpush.msra.mxu0 0.0
    %481 = vmatpush.msra.mxu0 0.0
    %482 = vmatpush.msra.mxu0 0.0
    %483 = vmatpush.msra.mxu0 0.0
    %484 = vmatpush.msra.mxu0 0.0
    %485 = vmatpush.msra.mxu0 0.0
    %486 = vmatpush.msra.mxu0 0.0
    %487 = vmatpush.msra.mxu0 0.0
    %488 = vmatpush.msra.mxu0 0.0
    %489 = vmatpush.msra.mxu0 0.0
    %490 = vmatpush.msra.mxu0 %v179
    %491 = vmatpush.msra.mxu0 %v178
    %492 = vmatpush.msra.mxu0 %v177
    %493 = vmatpush.msra.mxu0 %v176
    %494 = vmatmul.f32.gmra.mxu0 %v476
    %v495 = vpop.f32.mrf.mxu0
    %v496 = vadd.f32 0.0, %v495
    %497 = vdwg.mxu0
    %499 = vrot.lane.b32.xlu0 %v472, 32
    %v500 = vpop.permute.xlu0 %499
    %v501 = vsel %vm110, %v500, 0
    %503 = vmatpush.msra.mxu0 0.0
    %504 = vmatpush.msra.mxu0 0.0
    %505 = vmatpush.msra.mxu0 0.0
    %506 = vmatpush.msra.mxu0 0.0
    %507 = vmatpush.msra.mxu0 0.0
    %508 = vmatpush.msra.mxu0 0.0
    %509 = vmatpush.msra.mxu0 0.0
    %510 = vmatpush.msra.mxu0 0.0
    %511 = vmatpush.msra.mxu0 0.0
    %512 = vmatpush.msra.mxu0 0.0
    %513 = vmatpush.msra.mxu0 0.0
    %514 = vmatpush.msra.mxu0 0.0
    %515 = vmatpush.msra.mxu0 %v175
    %516 = vmatpush.msra.mxu0 %v174
    %517 = vmatpush.msra.mxu0 %v173
    %518 = vmatpush.msra.mxu0 %v172
    %519 = vmatmul.f32.gmra.mxu0 %v501
    %v520 = vpop.f32.mrf.mxu0
    %v521 = vadd.f32 %v496, %v520
    %522 = vdwg.mxu0
    %v523 = vadd.f32 %v521, %v227
    %v524 = vxor.u32 %v523, 2147483648
    %v525 = vmul.f32 %v524, 1.442695
    %v526 = vpow.pop %v525
    %v527 = vadd.f32 %v526, 1.0
    %v528 = vrcp.pop %v527
    %v529 = vmul.f32 %v527, %v528
    %v530 = vsub.f32 1.0, %v529
    %v531 = vmul.f32 %v528, %v530
    %v532 = vadd.f32 %v528, %v531
    %vm533 = vweird.f32 %v527
    %vm534 = vweird.f32 %v528
    %vm535 = vmor %vm533, %vm534
    %v536 = vsel %vm535, %v528, %v532
    %v537 = vand.u32 2147483647, %v527
    %vm538 = vcmp.eq.f32.partialorder %v537, 8.507059e+37
    %v539 = vand.u32 %v527, 2147483648
    %v540 = vor.u32 1.1754944e-38, %v539
    %v541 = vsel %vm538, %v540, %v536
    %v542 = vmul.f32 1.0, %v541
    %v543 = vtanh.pop %v523
    %v544 = vmul.f32 %v542, %v407
    %546 = vrot.lane.b32.xlu0 %v543, 64
    %v547 = vpop.permute.xlu0 %546
    %v549 = vmul.f32 %v542, %v547
    %551 = vrot.lane.b32.xlu0 %v549, 32
    %v552 = vpop.permute.xlu0 %551
    %v554 = vadd.f32 %v544, %v552
    %v555 = vtanh.pop %v554
    %557 = vrot.lane.b32.xlu0 %v555, 64
    %v558 = vpop.permute.xlu0 %557
    %v560 = vmul.f32 %v542, %v558
    %v561 = vld [vmem:[#allocation2 + $0x6] sm:$0x3]
    %562 = vmatpush.msra.mxu0 0.0
    %563 = vmatpush.msra.mxu0 0.0
    %564 = vmatpush.msra.mxu0 0.0
    %565 = vmatpush.msra.mxu0 0.0
    %566 = vmatpush.msra.mxu0 0.0
    %567 = vmatpush.msra.mxu0 0.0
    %568 = vmatpush.msra.mxu0 0.0
    %569 = vmatpush.msra.mxu0 0.0
    %570 = vmatpush.msra.mxu0 0.0
    %571 = vmatpush.msra.mxu0 0.0
    %572 = vmatpush.msra.mxu0 0.0
    %573 = vmatpush.msra.mxu0 0.0
    %574 = vmatpush.msra.mxu0 %v109
    %575 = vmatpush.msra.mxu0 %v108
    %576 = vmatpush.msra.mxu0 %v107
    %577 = vmatpush.msra.mxu0 %v106
    %578 = vmatmul.f32.gmra.mxu0 %v501
    %v579 = vpop.f32.mrf.mxu0
    %v580 = vadd.f32 0.0, %v579
    %581 = vdwg.mxu0
    %v582 = vadd.f32 %v561, %v580
    %v583 = vxor.u32 %v582, 2147483648
    %v584 = vmul.f32 %v583, 1.442695
    %v585 = vpow.pop %v584
    %v586 = vadd.f32 %v585, 1.0
    %v587 = vrcp.pop %v586
    %v588 = vmul.f32 %v586, %v587
    %v589 = vsub.f32 1.0, %v588
    %v590 = vmul.f32 %v587, %v589
    %v591 = vadd.f32 %v587, %v590
    %vm592 = vweird.f32 %v586
    %vm593 = vweird.f32 %v587
    %vm594 = vmor %vm592, %vm593
    %v595 = vsel %vm594, %v587, %v591
    %v596 = vand.u32 2147483647, %v586
    %vm597 = vcmp.eq.f32.partialorder %v596, 8.507059e+37
    %v598 = vand.u32 %v586, 2147483648
    %v599 = vor.u32 1.1754944e-38, %v598
    %v600 = vsel %vm597, %v599, %v595
    %v601 = vmul.f32 1.0, %v600
    %v602 = vtanh.pop %v582
    %v603 = vmul.f32 %v601, %v466
    %605 = vrot.lane.b32.xlu0 %v602, 64
    %v606 = vpop.permute.xlu0 %605
    %v608 = vmul.f32 %v601, %v606
    %610 = vrot.lane.b32.xlu0 %v608, 32
    %v611 = vpop.permute.xlu0 %610
    %v613 = vadd.f32 %v603, %v611
    %v614 = vtanh.pop %v613
    %616 = vrot.lane.b32.xlu0 %v614, 64
    %v617 = vpop.permute.xlu0 %616
    %v619 = vmul.f32 %v601, %v617
    %621 = vrot.lane.b32.xlu0 %v560, 32
    %v622 = vpop.permute.xlu0 %621
    %v623 = vsel %vm110, %v622, 0
    %625 = vmatpush.msra.mxu0 0.0
    %626 = vmatpush.msra.mxu0 0.0
    %627 = vmatpush.msra.mxu0 0.0
    %628 = vmatpush.msra.mxu0 0.0
    %629 = vmatpush.msra.mxu0 0.0
    %630 = vmatpush.msra.mxu0 0.0
    %631 = vmatpush.msra.mxu0 0.0
    %632 = vmatpush.msra.mxu0 0.0
    %633 = vmatpush.msra.mxu0 0.0
    %634 = vmatpush.msra.mxu0 0.0
    %635 = vmatpush.msra.mxu0 0.0
    %636 = vmatpush.msra.mxu0 0.0
    %637 = vmatpush.msra.mxu0 %v179
    %638 = vmatpush.msra.mxu0 %v178
    %639 = vmatpush.msra.mxu0 %v177
    %640 = vmatpush.msra.mxu0 %v176
    %641 = vmatmul.f32.gmra.mxu0 %v623
    %v642 = vpop.f32.mrf.mxu0
    %v643 = vadd.f32 0.0, %v642
    %644 = vdwg.mxu0
    %646 = vrot.lane.b32.xlu0 %v619, 32
    %v647 = vpop.permute.xlu0 %646
    %v648 = vsel %vm110, %v647, 0
    %650 = vmatpush.msra.mxu0 0.0
    %651 = vmatpush.msra.mxu0 0.0
    %652 = vmatpush.msra.mxu0 0.0
    %653 = vmatpush.msra.mxu0 0.0
    %654 = vmatpush.msra.mxu0 0.0
    %655 = vmatpush.msra.mxu0 0.0
    %656 = vmatpush.msra.mxu0 0.0
    %657 = vmatpush.msra.mxu0 0.0
    %658 = vmatpush.msra.mxu0 0.0
    %659 = vmatpush.msra.mxu0 0.0
    %660 = vmatpush.msra.mxu0 0.0
    %661 = vmatpush.msra.mxu0 0.0
    %662 = vmatpush.msra.mxu0 %v175
    %663 = vmatpush.msra.mxu0 %v174
    %664 = vmatpush.msra.mxu0 %v173
    %665 = vmatpush.msra.mxu0 %v172
    %666 = vmatmul.f32.gmra.mxu0 %v648
    %v667 = vpop.f32.mrf.mxu0
    %v668 = vadd.f32 %v643, %v667
    %669 = vdwg.mxu0
    %v670 = vadd.f32 %v668, %v227
    %v671 = vxor.u32 %v670, 2147483648
    %v672 = vmul.f32 %v671, 1.442695
    %v673 = vpow.pop %v672
    %v674 = vadd.f32 %v673, 1.0
    %v675 = vrcp.pop %v674
    %v676 = vmul.f32 %v674, %v675
    %v677 = vsub.f32 1.0, %v676
    %v678 = vmul.f32 %v675, %v677
    %v679 = vadd.f32 %v675, %v678
    %vm680 = vweird.f32 %v674
    %vm681 = vweird.f32 %v675
    %vm682 = vmor %vm680, %vm681
    %v683 = vsel %vm682, %v675, %v679
    %v684 = vand.u32 2147483647, %v674
    %vm685 = vcmp.eq.f32.partialorder %v684, 8.507059e+37
    %v686 = vand.u32 %v674, 2147483648
    %v687 = vor.u32 1.1754944e-38, %v686
    %v688 = vsel %vm685, %v687, %v683
    %v689 = vmul.f32 1.0, %v688
    %v690 = vtanh.pop %v670
    %v691 = vmul.f32 %v689, %v554
    %693 = vrot.lane.b32.xlu0 %v690, 64
    %v694 = vpop.permute.xlu0 %693
    %v696 = vmul.f32 %v689, %v694
    %698 = vrot.lane.b32.xlu0 %v696, 32
    %v699 = vpop.permute.xlu0 %698
    %v701 = vadd.f32 %v691, %v699
    %v702 = vtanh.pop %v701
    %704 = vrot.lane.b32.xlu0 %v702, 64
    %v705 = vpop.permute.xlu0 %704
    %v707 = vmul.f32 %v689, %v705
    %v708 = vld [vmem:[#allocation2 + $0x8] sm:$0x3]
    %709 = vmatpush.msra.mxu0 0.0
    %710 = vmatpush.msra.mxu0 0.0
    %711 = vmatpush.msra.mxu0 0.0
    %712 = vmatpush.msra.mxu0 0.0
    %713 = vmatpush.msra.mxu0 0.0
    %714 = vmatpush.msra.mxu0 0.0
    %715 = vmatpush.msra.mxu0 0.0
    %716 = vmatpush.msra.mxu0 0.0
    %717 = vmatpush.msra.mxu0 0.0
    %718 = vmatpush.msra.mxu0 0.0
    %719 = vmatpush.msra.mxu0 0.0
    %720 = vmatpush.msra.mxu0 0.0
    %721 = vmatpush.msra.mxu0 %v109
    %722 = vmatpush.msra.mxu0 %v108
    %723 = vmatpush.msra.mxu0 %v107
    %724 = vmatpush.msra.mxu0 %v106
    %725 = vmatmul.f32.gmra.mxu0 %v648
    %v726 = vpop.f32.mrf.mxu0
    %v727 = vadd.f32 0.0, %v726
    %728 = vdwg.mxu0
    %v729 = vadd.f32 %v708, %v727
    %v730 = vxor.u32 %v729, 2147483648
    %v731 = vmul.f32 %v730, 1.442695
    %v732 = vpow.pop %v731
    %v733 = vadd.f32 %v732, 1.0
    %v734 = vrcp.pop %v733
    %v735 = vmul.f32 %v733, %v734
    %v736 = vsub.f32 1.0, %v735
    %v737 = vmul.f32 %v734, %v736
    %v738 = vadd.f32 %v734, %v737
    %vm739 = vweird.f32 %v733
    %vm740 = vweird.f32 %v734
    %vm741 = vmor %vm739, %vm740
    %v742 = vsel %vm741, %v734, %v738
    %v743 = vand.u32 2147483647, %v733
    %vm744 = vcmp.eq.f32.partialorder %v743, 8.507059e+37
    %v745 = vand.u32 %v733, 2147483648
    %v746 = vor.u32 1.1754944e-38, %v745
    %v747 = vsel %vm744, %v746, %v742
    %v748 = vmul.f32 1.0, %v747
    %v749 = vtanh.pop %v729
    %v750 = vmul.f32 %v748, %v613
    %752 = vrot.lane.b32.xlu0 %v749, 64
    %v753 = vpop.permute.xlu0 %752
    %v755 = vmul.f32 %v748, %v753
    %757 = vrot.lane.b32.xlu0 %v755, 32
    %v758 = vpop.permute.xlu0 %757
    %v760 = vadd.f32 %v750, %v758
    %v761 = vtanh.pop %v760
    %763 = vrot.lane.b32.xlu0 %v761, 64
    %v764 = vpop.permute.xlu0 %763
    %v766 = vmul.f32 %v748, %v764
    %768 = vrot.lane.b32.xlu0 %v707, 32
    %v769 = vpop.permute.xlu0 %768
    %v770 = vsel %vm110, %v769, 0
    %772 = vmatpush.msra.mxu0 0.0
    %773 = vmatpush.msra.mxu0 0.0
    %774 = vmatpush.msra.mxu0 0.0
    %775 = vmatpush.msra.mxu0 0.0
    %776 = vmatpush.msra.mxu0 0.0
    %777 = vmatpush.msra.mxu0 0.0
    %778 = vmatpush.msra.mxu0 0.0
    %779 = vmatpush.msra.mxu0 0.0
    %780 = vmatpush.msra.mxu0 0.0
    %781 = vmatpush.msra.mxu0 0.0
    %782 = vmatpush.msra.mxu0 0.0
    %783 = vmatpush.msra.mxu0 0.0
    %784 = vmatpush.msra.mxu0 %v179
    %785 = vmatpush.msra.mxu0 %v178
    %786 = vmatpush.msra.mxu0 %v177
    %787 = vmatpush.msra.mxu0 %v176
    %788 = vmatmul.f32.gmra.mxu0 %v770
    %v789 = vpop.f32.mrf.mxu0
    %v790 = vadd.f32 0.0, %v789
    %791 = vdwg.mxu0
    %793 = vrot.lane.b32.xlu0 %v766, 32
    %v794 = vpop.permute.xlu0 %793
    %v795 = vsel %vm110, %v794, 0
    %797 = vmatpush.msra.mxu0 0.0
    %798 = vmatpush.msra.mxu0 0.0
    %799 = vmatpush.msra.mxu0 0.0
    %800 = vmatpush.msra.mxu0 0.0
    %801 = vmatpush.msra.mxu0 0.0
    %802 = vmatpush.msra.mxu0 0.0
    %803 = vmatpush.msra.mxu0 0.0
    %804 = vmatpush.msra.mxu0 0.0
    %805 = vmatpush.msra.mxu0 0.0
    %806 = vmatpush.msra.mxu0 0.0
    %807 = vmatpush.msra.mxu0 0.0
    %808 = vmatpush.msra.mxu0 0.0
    %809 = vmatpush.msra.mxu0 %v175
    %810 = vmatpush.msra.mxu0 %v174
    %811 = vmatpush.msra.mxu0 %v173
    %812 = vmatpush.msra.mxu0 %v172
    %813 = vmatmul.f32.gmra.mxu0 %v795
    %v814 = vpop.f32.mrf.mxu0
    %v815 = vadd.f32 %v790, %v814
    %816 = vdwg.mxu0
    %v817 = vadd.f32 %v815, %v227
    %v818 = vxor.u32 %v817, 2147483648
    %v819 = vmul.f32 %v818, 1.442695
    %v820 = vpow.pop %v819
    %v821 = vadd.f32 %v820, 1.0
    %v822 = vrcp.pop %v821
    %v823 = vmul.f32 %v821, %v822
    %v824 = vsub.f32 1.0, %v823
    %v825 = vmul.f32 %v822, %v824
    %v826 = vadd.f32 %v822, %v825
    %vm827 = vweird.f32 %v821
    %vm828 = vweird.f32 %v822
    %vm829 = vmor %vm827, %vm828
    %v830 = vsel %vm829, %v822, %v826
    %v831 = vand.u32 2147483647, %v821
    %vm832 = vcmp.eq.f32.partialorder %v831, 8.507059e+37
    %v833 = vand.u32 %v821, 2147483648
    %v834 = vor.u32 1.1754944e-38, %v833
    %v835 = vsel %vm832, %v834, %v830
    %v836 = vmul.f32 1.0, %v835
    %v837 = vtanh.pop %v817
    %v838 = vmul.f32 %v836, %v701
    %840 = vrot.lane.b32.xlu0 %v837, 64
    %v841 = vpop.permute.xlu0 %840
    %v843 = vmul.f32 %v836, %v841
    %845 = vrot.lane.b32.xlu0 %v843, 32
    %v846 = vpop.permute.xlu0 %845
    %v848 = vadd.f32 %v838, %v846
    %v849 = vtanh.pop %v848
    %851 = vrot.lane.b32.xlu0 %v849, 64
    %v852 = vpop.permute.xlu0 %851
    %v854 = vmul.f32 %v836, %v852
    %v855 = vld [vmem:[#allocation2 + $0xa] sm:$0x3]
    %856 = vmatpush.msra.mxu0 0.0
    %857 = vmatpush.msra.mxu0 0.0
    %858 = vmatpush.msra.mxu0 0.0
    %859 = vmatpush.msra.mxu0 0.0
    %860 = vmatpush.msra.mxu0 0.0
    %861 = vmatpush.msra.mxu0 0.0
    %862 = vmatpush.msra.mxu0 0.0
    %863 = vmatpush.msra.mxu0 0.0
    %864 = vmatpush.msra.mxu0 0.0
    %865 = vmatpush.msra.mxu0 0.0
    %866 = vmatpush.msra.mxu0 0.0
    %867 = vmatpush.msra.mxu0 0.0
    %868 = vmatpush.msra.mxu0 %v109
    %869 = vmatpush.msra.mxu0 %v108
    %870 = vmatpush.msra.mxu0 %v107
    %871 = vmatpush.msra.mxu0 %v106
    %872 = vmatmul.f32.gmra.mxu0 %v795
    %v873 = vpop.f32.mrf.mxu0
    %v874 = vadd.f32 0.0, %v873
    %875 = vdwg.mxu0
    %v876 = vadd.f32 %v855, %v874
    %v877 = vxor.u32 %v876, 2147483648
    %v878 = vmul.f32 %v877, 1.442695
    %v879 = vpow.pop %v878
    %v880 = vadd.f32 %v879, 1.0
    %v881 = vrcp.pop %v880
    %v882 = vmul.f32 %v880, %v881
    %v883 = vsub.f32 1.0, %v882
    %v884 = vmul.f32 %v881, %v883
    %v885 = vadd.f32 %v881, %v884
    %vm886 = vweird.f32 %v880
    %vm887 = vweird.f32 %v881
    %vm888 = vmor %vm886, %vm887
    %v889 = vsel %vm888, %v881, %v885
    %v890 = vand.u32 2147483647, %v880
    %vm891 = vcmp.eq.f32.partialorder %v890, 8.507059e+37
    %v892 = vand.u32 %v880, 2147483648
    %v893 = vor.u32 1.1754944e-38, %v892
    %v894 = vsel %vm891, %v893, %v889
    %v895 = vmul.f32 1.0, %v894
    %v896 = vtanh.pop %v876
    %v897 = vmul.f32 %v895, %v760
    %899 = vrot.lane.b32.xlu0 %v896, 64
    %v900 = vpop.permute.xlu0 %899
    %v902 = vmul.f32 %v895, %v900
    %904 = vrot.lane.b32.xlu0 %v902, 32
    %v905 = vpop.permute.xlu0 %904
    %v907 = vadd.f32 %v897, %v905
    %v908 = vtanh.pop %v907
    %910 = vrot.lane.b32.xlu0 %v908, 64
    %v911 = vpop.permute.xlu0 %910
    %v913 = vmul.f32 %v895, %v911
    %915 = vrot.lane.b32.xlu0 %v854, 32
    %v916 = vpop.permute.xlu0 %915
    %v917 = vsel %vm110, %v916, 0
    %919 = vmatpush.msra.mxu0 0.0
    %920 = vmatpush.msra.mxu0 0.0
    %921 = vmatpush.msra.mxu0 0.0
    %922 = vmatpush.msra.mxu0 0.0
    %923 = vmatpush.msra.mxu0 0.0
    %924 = vmatpush.msra.mxu0 0.0
    %925 = vmatpush.msra.mxu0 0.0
    %926 = vmatpush.msra.mxu0 0.0
    %927 = vmatpush.msra.mxu0 0.0
    %928 = vmatpush.msra.mxu0 0.0
    %929 = vmatpush.msra.mxu0 0.0
    %930 = vmatpush.msra.mxu0 0.0
    %931 = vmatpush.msra.mxu0 %v179
    %932 = vmatpush.msra.mxu0 %v178
    %933 = vmatpush.msra.mxu0 %v177
    %934 = vmatpush.msra.mxu0 %v176
    %935 = vmatmul.f32.gmra.mxu0 %v917
    %v936 = vpop.f32.mrf.mxu0
    %v937 = vadd.f32 0.0, %v936
    %938 = vdwg.mxu0
    %940 = vrot.lane.b32.xlu0 %v913, 32
    %v941 = vpop.permute.xlu0 %940
    %v942 = vsel %vm110, %v941, 0
    %944 = vmatpush.msra.mxu0 0.0
    %945 = vmatpush.msra.mxu0 0.0
    %946 = vmatpush.msra.mxu0 0.0
    %947 = vmatpush.msra.mxu0 0.0
    %948 = vmatpush.msra.mxu0 0.0
    %949 = vmatpush.msra.mxu0 0.0
    %950 = vmatpush.msra.mxu0 0.0
    %951 = vmatpush.msra.mxu0 0.0
    %952 = vmatpush.msra.mxu0 0.0
    %953 = vmatpush.msra.mxu0 0.0
    %954 = vmatpush.msra.mxu0 0.0
    %955 = vmatpush.msra.mxu0 0.0
    %956 = vmatpush.msra.mxu0 %v175
    %957 = vmatpush.msra.mxu0 %v174
    %958 = vmatpush.msra.mxu0 %v173
    %959 = vmatpush.msra.mxu0 %v172
    %960 = vmatmul.f32.gmra.mxu0 %v942
    %v961 = vpop.f32.mrf.mxu0
    %v962 = vadd.f32 %v937, %v961
    %963 = vdwg.mxu0
    %v964 = vadd.f32 %v962, %v227
    %v965 = vxor.u32 %v964, 2147483648
    %v966 = vmul.f32 %v965, 1.442695
    %v967 = vpow.pop %v966
    %v968 = vadd.f32 %v967, 1.0
    %v969 = vrcp.pop %v968
    %v970 = vmul.f32 %v968, %v969
    %v971 = vsub.f32 1.0, %v970
    %v972 = vmul.f32 %v969, %v971
    %v973 = vadd.f32 %v969, %v972
    %vm974 = vweird.f32 %v968
    %vm975 = vweird.f32 %v969
    %vm976 = vmor %vm974, %vm975
    %v977 = vsel %vm976, %v969, %v973
    %v978 = vand.u32 2147483647, %v968
    %vm979 = vcmp.eq.f32.partialorder %v978, 8.507059e+37
    %v980 = vand.u32 %v968, 2147483648
    %v981 = vor.u32 1.1754944e-38, %v980
    %v982 = vsel %vm979, %v981, %v977
    %v983 = vmul.f32 1.0, %v982
    %v984 = vtanh.pop %v964
    %v985 = vmul.f32 %v983, %v848
    %987 = vrot.lane.b32.xlu0 %v984, 64
    %v988 = vpop.permute.xlu0 %987
    %v990 = vmul.f32 %v983, %v988
    %992 = vrot.lane.b32.xlu0 %v990, 32
    %v993 = vpop.permute.xlu0 %992
    %v995 = vadd.f32 %v985, %v993
    %v996 = vtanh.pop %v995
    %998 = vrot.lane.b32.xlu0 %v996, 64
    %v999 = vpop.permute.xlu0 %998
    %v1001 = vmul.f32 %v983, %v999
    %v1002 = vld [vmem:[#allocation2 + $0xc] sm:$0x3]
    %1003 = vmatpush.msra.mxu0 0.0
    %1004 = vmatpush.msra.mxu0 0.0
    %1005 = vmatpush.msra.mxu0 0.0
    %1006 = vmatpush.msra.mxu0 0.0
    %1007 = vmatpush.msra.mxu0 0.0
    %1008 = vmatpush.msra.mxu0 0.0
    %1009 = vmatpush.msra.mxu0 0.0
    %1010 = vmatpush.msra.mxu0 0.0
    %1011 = vmatpush.msra.mxu0 0.0
    %1012 = vmatpush.msra.mxu0 0.0
    %1013 = vmatpush.msra.mxu0 0.0
    %1014 = vmatpush.msra.mxu0 0.0
    %1015 = vmatpush.msra.mxu0 %v109
    %1016 = vmatpush.msra.mxu0 %v108
    %1017 = vmatpush.msra.mxu0 %v107
    %1018 = vmatpush.msra.mxu0 %v106
    %1019 = vmatmul.f32.gmra.mxu0 %v942
    %v1020 = vpop.f32.mrf.mxu0
    %v1021 = vadd.f32 0.0, %v1020
    %1022 = vdwg.mxu0
    %v1023 = vadd.f32 %v1002, %v1021
    %v1024 = vxor.u32 %v1023, 2147483648
    %v1025 = vmul.f32 %v1024, 1.442695
    %v1026 = vpow.pop %v1025
    %v1027 = vadd.f32 %v1026, 1.0
    %v1028 = vrcp.pop %v1027
    %v1029 = vmul.f32 %v1027, %v1028
    %v1030 = vsub.f32 1.0, %v1029
    %v1031 = vmul.f32 %v1028, %v1030
    %v1032 = vadd.f32 %v1028, %v1031
    %vm1033 = vweird.f32 %v1027
    %vm1034 = vweird.f32 %v1028
    %vm1035 = vmor %vm1033, %vm1034
    %v1036 = vsel %vm1035, %v1028, %v1032
    %v1037 = vand.u32 2147483647, %v1027
    %vm1038 = vcmp.eq.f32.partialorder %v1037, 8.507059e+37
    %v1039 = vand.u32 %v1027, 2147483648
    %v1040 = vor.u32 1.1754944e-38, %v1039
    %v1041 = vsel %vm1038, %v1040, %v1036
    %v1042 = vmul.f32 1.0, %v1041
    %v1043 = vtanh.pop %v1023
    %v1044 = vmul.f32 %v1042, %v907
    %1046 = vrot.lane.b32.xlu0 %v1043, 64
    %v1047 = vpop.permute.xlu0 %1046
    %v1049 = vmul.f32 %v1042, %v1047
    %1051 = vrot.lane.b32.xlu0 %v1049, 32
    %v1052 = vpop.permute.xlu0 %1051
    %v1054 = vadd.f32 %v1044, %v1052
    %v1055 = vtanh.pop %v1054
    %1057 = vrot.lane.b32.xlu0 %v1055, 64
    %v1058 = vpop.permute.xlu0 %1057
    %v1060 = vmul.f32 %v1042, %v1058
    %1062 = vrot.lane.b32.xlu0 %v1001, 32
    %v1063 = vpop.permute.xlu0 %1062
    %v1064 = vsel %vm110, %v1063, 0
    %1066 = vmatpush.msra.mxu0 0.0
    %1067 = vmatpush.msra.mxu0 0.0
    %1068 = vmatpush.msra.mxu0 0.0
    %1069 = vmatpush.msra.mxu0 0.0
    %1070 = vmatpush.msra.mxu0 0.0
    %1071 = vmatpush.msra.mxu0 0.0
    %1072 = vmatpush.msra.mxu0 0.0
    %1073 = vmatpush.msra.mxu0 0.0
    %1074 = vmatpush.msra.mxu0 0.0
    %1075 = vmatpush.msra.mxu0 0.0
    %1076 = vmatpush.msra.mxu0 0.0
    %1077 = vmatpush.msra.mxu0 0.0
    %1078 = vmatpush.msra.mxu0 %v179
    %1079 = vmatpush.msra.mxu0 %v178
    %1080 = vmatpush.msra.mxu0 %v177
    %1081 = vmatpush.msra.mxu0 %v176
    %1082 = vmatmul.f32.gmra.mxu0 %v1064
    %v1083 = vpop.f32.mrf.mxu0
    %v1084 = vadd.f32 0.0, %v1083
    %1085 = vdwg.mxu0
    %1087 = vrot.lane.b32.xlu0 %v1060, 32
    %v1088 = vpop.permute.xlu0 %1087
    %v1089 = vsel %vm110, %v1088, 0
    %1091 = vmatpush.msra.mxu0 0.0
    %1092 = vmatpush.msra.mxu0 0.0
    %1093 = vmatpush.msra.mxu0 0.0
    %1094 = vmatpush.msra.mxu0 0.0
    %1095 = vmatpush.msra.mxu0 0.0
    %1096 = vmatpush.msra.mxu0 0.0
    %1097 = vmatpush.msra.mxu0 0.0
    %1098 = vmatpush.msra.mxu0 0.0
    %1099 = vmatpush.msra.mxu0 0.0
    %1100 = vmatpush.msra.mxu0 0.0
    %1101 = vmatpush.msra.mxu0 0.0
    %1102 = vmatpush.msra.mxu0 0.0
    %1103 = vmatpush.msra.mxu0 %v175
    %1104 = vmatpush.msra.mxu0 %v174
    %1105 = vmatpush.msra.mxu0 %v173
    %1106 = vmatpush.msra.mxu0 %v172
    %1107 = vmatmul.f32.gmra.mxu0 %v1089
    %v1108 = vpop.f32.mrf.mxu0
    %v1109 = vadd.f32 %v1084, %v1108
    %1110 = vdwg.mxu0
    %v1111 = vadd.f32 %v1109, %v227
    %v1112 = vxor.u32 %v1111, 2147483648
    %v1113 = vmul.f32 %v1112, 1.442695
    %v1114 = vpow.pop %v1113
    %v1115 = vadd.f32 %v1114, 1.0
    %v1116 = vrcp.pop %v1115
    %v1117 = vmul.f32 %v1115, %v1116
    %v1118 = vsub.f32 1.0, %v1117
    %v1119 = vmul.f32 %v1116, %v1118
    %v1120 = vadd.f32 %v1116, %v1119
    %vm1121 = vweird.f32 %v1115
    %vm1122 = vweird.f32 %v1116
    %vm1123 = vmor %vm1121, %vm1122
    %v1124 = vsel %vm1123, %v1116, %v1120
    %v1125 = vand.u32 2147483647, %v1115
    %vm1126 = vcmp.eq.f32.partialorder %v1125, 8.507059e+37
    %v1127 = vand.u32 %v1115, 2147483648
    %v1128 = vor.u32 1.1754944e-38, %v1127
    %v1129 = vsel %vm1126, %v1128, %v1124
    %v1130 = vmul.f32 1.0, %v1129
    %v1131 = vtanh.pop %v1111
    %v1132 = vmul.f32 %v1130, %v995
    %1134 = vrot.lane.b32.xlu0 %v1131, 64
    %v1135 = vpop.permute.xlu0 %1134
    %v1137 = vmul.f32 %v1130, %v1135
    %1139 = vrot.lane.b32.xlu0 %v1137, 32
    %v1140 = vpop.permute.xlu0 %1139
    %v1142 = vadd.f32 %v1132, %v1140
    %v1143 = vtanh.pop %v1142
    %1145 = vrot.lane.b32.xlu0 %v1143, 64
    %v1146 = vpop.permute.xlu0 %1145
    %v1148 = vmul.f32 %v1130, %v1146
    %v1149 = vld [vmem:[#allocation2 + $0xe] sm:$0x3]
    %1150 = vmatpush.msra.mxu0 0.0
    %1151 = vmatpush.msra.mxu0 0.0
    %1152 = vmatpush.msra.mxu0 0.0
    %1153 = vmatpush.msra.mxu0 0.0
    %1154 = vmatpush.msra.mxu0 0.0
    %1155 = vmatpush.msra.mxu0 0.0
    %1156 = vmatpush.msra.mxu0 0.0
    %1157 = vmatpush.msra.mxu0 0.0
    %1158 = vmatpush.msra.mxu0 0.0
    %1159 = vmatpush.msra.mxu0 0.0
    %1160 = vmatpush.msra.mxu0 0.0
    %1161 = vmatpush.msra.mxu0 0.0
    %1162 = vmatpush.msra.mxu0 %v109
    %1163 = vmatpush.msra.mxu0 %v108
    %1164 = vmatpush.msra.mxu0 %v107
    %1165 = vmatpush.msra.mxu0 %v106
    %1166 = vmatmul.f32.gmra.mxu0 %v1089
    %v1167 = vpop.f32.mrf.mxu0
    %v1168 = vadd.f32 0.0, %v1167
    %1169 = vdwg.mxu0
    %v1170 = vadd.f32 %v1149, %v1168
    %v1171 = vxor.u32 %v1170, 2147483648
    %v1172 = vmul.f32 %v1171, 1.442695
    %v1173 = vpow.pop %v1172
    %v1174 = vadd.f32 %v1173, 1.0
    %v1175 = vrcp.pop %v1174
    %v1176 = vmul.f32 %v1174, %v1175
    %v1177 = vsub.f32 1.0, %v1176
    %v1178 = vmul.f32 %v1175, %v1177
    %v1179 = vadd.f32 %v1175, %v1178
    %vm1180 = vweird.f32 %v1174
    %vm1181 = vweird.f32 %v1175
    %vm1182 = vmor %vm1180, %vm1181
    %v1183 = vsel %vm1182, %v1175, %v1179
    %v1184 = vand.u32 2147483647, %v1174
    %vm1185 = vcmp.eq.f32.partialorder %v1184, 8.507059e+37
    %v1186 = vand.u32 %v1174, 2147483648
    %v1187 = vor.u32 1.1754944e-38, %v1186
    %v1188 = vsel %vm1185, %v1187, %v1183
    %v1189 = vmul.f32 1.0, %v1188
    %v1190 = vtanh.pop %v1170
    %v1191 = vmul.f32 %v1189, %v1054
    %1193 = vrot.lane.b32.xlu0 %v1190, 64
    %v1194 = vpop.permute.xlu0 %1193
    %v1196 = vmul.f32 %v1189, %v1194
    %1198 = vrot.lane.b32.xlu0 %v1196, 32
    %v1199 = vpop.permute.xlu0 %1198
    %v1201 = vadd.f32 %v1191, %v1199
    %v1202 = vtanh.pop %v1201
    %1204 = vrot.lane.b32.xlu0 %v1202, 64
    %v1205 = vpop.permute.xlu0 %1204
    %v1207 = vmul.f32 %v1189, %v1205
    %1209 = vrot.lane.b32.xlu0 %v1148, 32
    %v1210 = vpop.permute.xlu0 %1209
    %v1211 = vsel %vm110, %v1210, 0
    %1213 = vmatpush.msra.mxu0 0.0
    %1214 = vmatpush.msra.mxu0 0.0
    %1215 = vmatpush.msra.mxu0 0.0
    %1216 = vmatpush.msra.mxu0 0.0
    %1217 = vmatpush.msra.mxu0 0.0
    %1218 = vmatpush.msra.mxu0 0.0
    %1219 = vmatpush.msra.mxu0 0.0
    %1220 = vmatpush.msra.mxu0 0.0
    %1221 = vmatpush.msra.mxu0 0.0
    %1222 = vmatpush.msra.mxu0 0.0
    %1223 = vmatpush.msra.mxu0 0.0
    %1224 = vmatpush.msra.mxu0 0.0
    %1225 = vmatpush.msra.mxu0 %v179
    %1226 = vmatpush.msra.mxu0 %v178
    %1227 = vmatpush.msra.mxu0 %v177
    %1228 = vmatpush.msra.mxu0 %v176
    %1229 = vmatmul.f32.gmra.mxu0 %v1211
    %v1230 = vpop.f32.mrf.mxu0
    %v1231 = vadd.f32 0.0, %v1230
    %1232 = vdwg.mxu0
    %1234 = vrot.lane.b32.xlu0 %v1207, 32
    %v1235 = vpop.permute.xlu0 %1234
    %v1236 = vsel %vm110, %v1235, 0
    %1238 = vmatpush.msra.mxu0 0.0
    %1239 = vmatpush.msra.mxu0 0.0
    %1240 = vmatpush.msra.mxu0 0.0
    %1241 = vmatpush.msra.mxu0 0.0
    %1242 = vmatpush.msra.mxu0 0.0
    %1243 = vmatpush.msra.mxu0 0.0
    %1244 = vmatpush.msra.mxu0 0.0
    %1245 = vmatpush.msra.mxu0 0.0
    %1246 = vmatpush.msra.mxu0 0.0
    %1247 = vmatpush.msra.mxu0 0.0
    %1248 = vmatpush.msra.mxu0 0.0
    %1249 = vmatpush.msra.mxu0 0.0
    %1250 = vmatpush.msra.mxu0 %v175
    %1251 = vmatpush.msra.mxu0 %v174
    %1252 = vmatpush.msra.mxu0 %v173
    %1253 = vmatpush.msra.mxu0 %v172
    %1254 = vmatmul.f32.gmra.mxu0 %v1236
    %v1255 = vpop.f32.mrf.mxu0
    %v1256 = vadd.f32 %v1231, %v1255
    %1257 = vdwg.mxu0
    %v1258 = vadd.f32 %v1256, %v227
    %v1259 = vxor.u32 %v1258, 2147483648
    %v1260 = vmul.f32 %v1259, 1.442695
    %v1261 = vpow.pop %v1260
    %v1262 = vadd.f32 %v1261, 1.0
    %v1263 = vrcp.pop %v1262
    %v1264 = vmul.f32 %v1262, %v1263
    %v1265 = vsub.f32 1.0, %v1264
    %v1266 = vmul.f32 %v1263, %v1265
    %v1267 = vadd.f32 %v1263, %v1266
    %vm1268 = vweird.f32 %v1262
    %vm1269 = vweird.f32 %v1263
    %vm1270 = vmor %vm1268, %vm1269
    %v1271 = vsel %vm1270, %v1263, %v1267
    %v1272 = vand.u32 2147483647, %v1262
    %vm1273 = vcmp.eq.f32.partialorder %v1272, 8.507059e+37
    %v1274 = vand.u32 %v1262, 2147483648
    %v1275 = vor.u32 1.1754944e-38, %v1274
    %v1276 = vsel %vm1273, %v1275, %v1271
    %v1277 = vmul.f32 1.0, %v1276
    %v1278 = vtanh.pop %v1258
    %v1279 = vmul.f32 %v1277, %v1142
    %1281 = vrot.lane.b32.xlu0 %v1278, 64
    %v1282 = vpop.permute.xlu0 %1281
    %v1284 = vmul.f32 %v1277, %v1282
    %1286 = vrot.lane.b32.xlu0 %v1284, 32
    %v1287 = vpop.permute.xlu0 %1286
    %v1289 = vadd.f32 %v1279, %v1287
    %v1290 = vtanh.pop %v1289
    %1292 = vrot.lane.b32.xlu0 %v1290, 64
    %v1293 = vpop.permute.xlu0 %1292
    %v1295 = vmul.f32 %v1277, %v1293
    %v1296 = vld [vmem:[%s7] sm:$0xff]
    %v1297 = vld [vmem:[%s7 + $0x8] sm:$0xff]
    %v1298 = vld [vmem:[%s7 + $0x10] sm:$0xff]
    %v1299 = vld [vmem:[%s7 + $0x18] sm:$0xff]
    %v1300 = vld [vmem:[%s8] sm:$0x1]
    %v1302 = vperm.slane %v1300, 0
    %1305 = vrot.lane.b32.xlu0 %v1295, 32
    %v1306 = vpop.permute.xlu0 %1305
    %v1307 = vsel %vm110, %v1306, 0
    %1309 = vmatpush.msra.mxu0 0.0
    %1310 = vmatpush.msra.mxu0 0.0
    %1311 = vmatpush.msra.mxu0 0.0
    %1312 = vmatpush.msra.mxu0 0.0
    %1313 = vmatpush.msra.mxu0 0.0
    %1314 = vmatpush.msra.mxu0 0.0
    %1315 = vmatpush.msra.mxu0 0.0
    %1316 = vmatpush.msra.mxu0 0.0
    %1317 = vmatpush.msra.mxu0 0.0
    %1318 = vmatpush.msra.mxu0 0.0
    %1319 = vmatpush.msra.mxu0 0.0
    %1320 = vmatpush.msra.mxu0 0.0
    %1321 = vmatpush.msra.mxu0 %v1299
    %1322 = vmatpush.msra.mxu0 %v1298
    %1323 = vmatpush.msra.mxu0 %v1297
    %1324 = vmatpush.msra.mxu0 %v1296
    %1325 = vmatmul.f32.gmra.mxu0 %v1307
    %v1326 = vpop.f32.mrf.mxu0
    %v1327 = vadd.f32 %v1302, %v1326
    %1328 = vdwg.mxu0
    %vm1329 = vcmask 25600
    %1330 = vst.msk [vmem:[#allocation8] sm:$0x3] %vm1329, %v1327
    // Predicated region
    $region46: #{lstm_model_forward.1} parent=1 // pred_check
      _
    $region47: #{lstm_model_forward.1} parent=1 // pred_check_branch
      %1332 = sbr.rel (0) target = $region49
    $region48: #{lstm_model_forward.1} parent=1 // pred_region
      %1334 = vsyncadd [#allocation5], 0
      %s1336 = sshll.u32 [#allocation8], 4
      %s1337 = int_to_ptr.vmem [resolvable:$true] %s1336
      %s1338 = sshll.u32 %s9, 4
      %s1339 = int_to_ptr.hbm [resolvable:$true] %s1338
      %1341 = dma.vmem_to_hbm [thread:$0]  %s1337, 32, %s1339, [#allocation5]
    $region49: #{lstm_model_forward.1} parent=1 // pred_fallthru
      _
    // Predicated region
    $region50: #{lstm_model_forward.1} parent=1 // pred_check
      _
    $region51: #{lstm_model_forward.1} parent=1 // pred_check_branch
      %1343 = sbr.rel (0) target = $region53
    $region52: #{lstm_model_forward.1} parent=1 // pred_region
      %1345 = dma.done [#allocation5], 32
    $region53: #{lstm_model_forward.1} parent=1 // pred_fallthru
      _
    %1346 = vsyncpa [#allocation4], 1
    %1347 = vsyncpa [#allocation7], 1
    %1348 = vsyncpa [#allocation5], 1

</llo_original>
